<compile_context>
chip_gen: v5e
topology: v5e:2x2
jax: 0.10.0
libtpu: 0.0.40
codegen_flags: <defaults>
</compile_context>

<pallas_src>
import functools

import jax
import jax.numpy as jnp
from jax.experimental import pallas as pl
from jax.experimental.pallas import tpu as pltpu

# ---- small, module-consistent hyper-parameters ---------------------------------
E        = 64     # args.emsize
E2       = E // 2
NUSER    = 16
NITEM    = 16
NTOKENS  = 256
TGT_LEN  = 8
SRC_LEN  = 4
N_BATCH  = 8
SEQ_LEN  = 8      # length of `seq` fed to the (stubbed) PETER encoder
LAMDA    = 0.1

# ---- packed weight-slab column layout (64 rows) --------------------------------
C_W1        = 0                    # W_1                       (64 lanes)
C_MLP_W1    = C_W1 + E             # mlp.linear1               (64)  fused w/ W_1
C_TOK       = 128                  # hidden2token              (256)
C_W2        = C_TOK + NTOKENS      # W_2                       (64)  fused w/ tok
#              448..512 : pad
C_DE_RE     = 512                  # de_re                     (64)
C_REMLP_W1  = C_DE_RE + E          # remlp.linear1             (64)  fused w/ de_re
C_PETER     = 640                  # PETER-stub projection     (64)
#              704..768 : pad
C_MLP_W2    = 768                  # mlp.linear2               (32)
C_REMLP_W2  = 800                  # remlp.linear2             (32)
WSLAB_W     = 832

# ---- bias/aux slab layout (1 row; cols [0, WSLAB_W) mirror the weight slab) ----
C_MLP_W3    = WSLAB_W              # mlp.linear3 weight row    (32)
C_REMLP_W3  = C_MLP_W3 + E2        # remlp.linear3 weight row  (32)
C_LIN1_B    = 896                  # linear1 bias              (64)
BSLAB_W     = 960

# ---- SMEM scalar layout ---------------------------------------------------------
S_DE_RA_W   = 0
S_DE_RA_B   = TGT_LEN
S_MLP_B3    = 2 * TGT_LEN
S_REMLP_B3  = 2 * TGT_LEN + 1
SCAL_LEN    = 2 * TGT_LEN + 2


# ================================ fused Pallas kernel ============================

def _fused_forward_kernel(scal_ref, inter_ref, wemb_ref, lin1_w_ref, w_ref, b_ref,
                          o1_ref, o2_ref, distri_ref, *, train, n, t, tgt):
    f32 = jnp.float32

    def dot(a, b):
        return jnp.dot(a, b, preferred_element_type=f32)

    # ---- rating branch (user/item interaction) ------------------------------
    uira = dot(inter_ref[...], lin1_w_ref[...]) + b_ref[:, C_LIN1_B:C_LIN1_B + E]

    # fused (8,64)x(64,128): [uira @ W_1 | uira @ mlp_w1 + mlp_b1]
    fa = dot(uira, w_ref[:, C_W1:C_MLP_W1 + E]) + b_ref[:, C_W1:C_MLP_W1 + E]
    ra_c = fa[:, :E]
    h1   = fa[:, E:]
    ra_s = uira - ra_c

    # rating MLP tail: Linear(E, E/2) then Linear(E/2, 1) as a VPU lane reduce
    # (no inter-layer activation, matching the reference MLP.forward).
    h2 = (dot(h1, w_ref[:, C_MLP_W2:C_MLP_W2 + E2])
          + b_ref[:, C_MLP_W2:C_MLP_W2 + E2])
    rating = (jnp.sum(h2 * b_ref[:, C_MLP_W3:C_MLP_W3 + E2], axis=-1, keepdims=True)
              + scal_ref[S_MLP_B3])

    # ---- review encoder -------------------------------------------------------
    # TODO(synk): the real PETER transformer is not part of the source module;
    # this is a deterministic single-layer stand-in (word-embed + linear + tanh).
    uira_rep = jnp.broadcast_to(uira[None], (t, n, E)).reshape(t * n, E)
    x = wemb_ref[...] + uira_rep
    h = jnp.tanh(dot(x, w_ref[:, C_PETER:C_PETER + E])
                 + b_ref[:, C_PETER:C_PETER + E])                      # (t*n, E)

    if train:
        # fused (t*n,64)x(64,320): [h @ tok_w + tok_b | h @ W_2]
        fb = dot(h, w_ref[:, C_TOK:C_W2 + E]) + b_ref[:, C_TOK:C_W2 + E]
        logits_base = fb[:, :NTOKENS]
        re_c = fb[:, NTOKENS:]
    else:
        re_c = dot(h, w_ref[:, C_W2:C_W2 + E])
    re_s = h - re_c

    # time means via unrolled, sublane-aligned static slices (no 3-D reshape)
    h_sum  = jnp.zeros((n, E), f32)
    rc_sum = jnp.zeros((n, E), f32)
    for k in range(t):
        h_sum  = h_sum + h[k * n:(k + 1) * n, :]
        rc_sum = rc_sum + re_c[k * n:(k + 1) * n, :]
    inv_t = 1.0 / t
    h_mean  = h_sum * inv_t
    rc_mean = rc_sum * inv_t
    rs_mean = h_mean - rc_mean

    # fused (3n,64)x(64,128): [means @ de_re_w + de_re_b | means @ remlp_w1 + b1]
    stacked = jnp.concatenate([h_mean, rc_mean, rs_mean], axis=0)       # (3n, E)
    fc = (dot(stacked, w_ref[:, C_DE_RE:C_REMLP_W1 + E])
          + b_ref[:, C_DE_RE:C_REMLP_W1 + E])
    de_re_all = fc[:, :E]                       # rows: [de_re | de_re_c | de_re_s]
    remlp_h1  = fc[2 * n:3 * n, E:]             # remlp runs on re_s.mean(0)

    r2 = (dot(remlp_h1, w_ref[:, C_REMLP_W2:C_REMLP_W2 + E2])
          + b_ref[:, C_REMLP_W2:C_REMLP_W2 + E2])
    remlp = (jnp.sum(r2 * b_ref[:, C_REMLP_W3:C_REMLP_W3 + E2], axis=-1, keepdims=True)
             + scal_ref[S_REMLP_B3])

    # ---- fused hidden2token + log_softmax ------------------------------------
    # (h + lamda*tile(ra_s)) @ tok_w + tok_b
    #   == (h @ tok_w + tok_b) + lamda * tile(ra_s @ tok_w)
    ras_tok = LAMDA * dot(ra_s, w_ref[:, C_TOK:C_TOK + NTOKENS])        # (n, V)
    if train:
        logits = logits_base + jnp.broadcast_to(
            ras_tok[None], (t, n, NTOKENS)).reshape(t * n, NTOKENS)
    else:
        logits = (dot(h[(t - 1) * n:t * n, :], w_ref[:, C_TOK:C_TOK + NTOKENS])
                  + b_ref[:, C_TOK:C_TOK + NTOKENS] + ras_tok)
    m = jnp.max(logits, axis=-1, keepdims=True)
    s = logits - m
    lse = jnp.log(jnp.sum(jnp.exp(s), axis=-1, keepdims=True))
    distri_ref[...] = s - lse

    # ---- lane-dense output slabs ----------------------------------------------
    # O1: everything with N rows, 8*E = 512 lanes wide.
    o1_ref[:, 0 * E:1 * E] = uira
    o1_ref[:, 1 * E:2 * E] = ra_c
    o1_ref[:, 2 * E:3 * E] = ra_s
    o1_ref[:, 3 * E:4 * E] = de_re_all[0 * n:1 * n]
    o1_ref[:, 4 * E:5 * E] = de_re_all[1 * n:2 * n]
    o1_ref[:, 5 * E:6 * E] = de_re_all[2 * n:3 * n]
    o1_ref[:, 6 * E:7 * E] = jnp.broadcast_to(rating, (n, E))
    o1_ref[:, 7 * E:8 * E] = jnp.broadcast_to(remlp, (n, E))

    # O2: everything with T*N (== TGT_LEN*N) rows, 6*E = 384 lanes wide.
    o2_ref[:, 0 * E:1 * E] = h
    o2_ref[:, 1 * E:2 * E] = re_c
    o2_ref[:, 2 * E:3 * E] = re_s
    # de_ra: Linear(1, tgt_len) applied element-wise; per-step scalar FMA from SMEM.
    for k in range(tgt):
        w_k = scal_ref[S_DE_RA_W + k]
        b_k = scal_ref[S_DE_RA_B + k]
        o2_ref[k * n:(k + 1) * n, 3 * E:4 * E] = uira * w_k + b_k
        o2_ref[k * n:(k + 1) * n, 4 * E:5 * E] = ra_c * w_k + b_k
        o2_ref[k * n:(k + 1) * n, 5 * E:6 * E] = ra_s * w_k + b_k


# ================================ full forward ===================================

def model_forward(params, user, item, rating, fake_r, seq, mode="Train"):
    p = params
    train = (mode == "Train")
    N = user.shape[0]
    T = seq.shape[0]
    # The review/de_ra output slab packs (T, N, E) and (TGT_LEN, N, E) tensors
    # side-by-side along lanes; this model uses T == TGT_LEN.
    assert T == TGT_LEN, "output-slab packing assumes seq_len == tgt_len"

    # Data-dependent embedding gathers stay in plain JAX (tiny).
    user_e = p["user_embed_ra"][user]                                   # (N, E)
    item_e = p["item_embed_ra"][item]                                   # (N, E)
    interaction = jnp.concatenate([user_e, item_e], axis=-1)            # (N, 2E)
    wemb = p["peter_word_embed"][seq].reshape(T * N, E)                 # (T*N, E)

    f32 = jnp.float32
    distri_rows = T * N if train else N
    out_shapes = (
        jax.ShapeDtypeStruct((N, 8 * E), f32),          # O1: rating-side slab
        jax.ShapeDtypeStruct((T * N, 6 * E), f32),      # O2: review / de_ra slab
        jax.ShapeDtypeStruct((distri_rows, NTOKENS), f32),
    )

    vmem = pl.BlockSpec(memory_space=pltpu.MemorySpace.VMEM)
    smem = pl.BlockSpec(memory_space=pltpu.MemorySpace.SMEM)
    kernel = functools.partial(_fused_forward_kernel,
                               train=train, n=N, t=T, tgt=TGT_LEN)

    o1, o2, distri = pl.pallas_call(
        kernel,
        out_shape=out_shapes,
        in_specs=[smem, vmem, vmem, vmem, vmem, vmem],
        out_specs=(vmem, vmem, vmem),
    )(p["scal"], interaction, wemb, p["lin1_w"], p["w_slab"], p["bias_slab"])

    # ---- unpack the lane-dense slabs --------------------------------------------
    uira_emb  = o1[:, 0 * E:1 * E]
    ra_c      = o1[:, 1 * E:2 * E]
    ra_s      = o1[:, 2 * E:3 * E]
    de_re     = o1[:, 3 * E:4 * E]
    de_re_c   = o1[:, 4 * E:5 * E]
    de_re_s   = o1[:, 5 * E:6 * E]
    rating_ln = o1[:, 6 * E]
    remlp     = o1[:, 7 * E]

    uire_emb  = o2[:, 0 * E:1 * E].reshape(T, N, E)
    re_c      = o2[:, 1 * E:2 * E].reshape(T, N, E)
    re_s      = o2[:, 2 * E:3 * E].reshape(T, N, E)
    de_ra     = o2[:, 3 * E:4 * E].reshape(TGT_LEN, N, E)
    de_ra_c   = o2[:, 4 * E:5 * E].reshape(TGT_LEN, N, E)
    de_ra_s   = o2[:, 5 * E:6 * E].reshape(TGT_LEN, N, E)
    con_hidden = uire_emb[0]                    # first encoder step (stub)

    ui_re_distri = distri.reshape(T, N, NTOKENS) if train else distri

    # Return signature matches the PyTorch module (de_re appears twice).
    return (ra_c, ra_s, re_c, re_s, uira_emb, uire_emb, de_ra, de_re,
            de_ra_c, de_ra_s, de_re, de_re_c, de_re_s, rating_ln,
            ui_re_distri, con_hidden, remlp)


# ================================ parameter packing ==============================

def pack_params(raw):
    """One-time packing of raw parameters into the kernel's VMEM/SMEM slabs."""
    f32 = jnp.float32
    w = jnp.zeros((E, WSLAB_W), f32)
    w = w.at[:, C_W1:C_W1 + E].set(raw["W_1"])
    w = w.at[:, C_MLP_W1:C_MLP_W1 + E].set(raw["mlp_w1"])
    w = w.at[:, C_TOK:C_TOK + NTOKENS].set(raw["tok_w"])
    w = w.at[:, C_W2:C_W2 + E].set(raw["W_2"])
    w = w.at[:, C_DE_RE:C_DE_RE + E].set(raw["de_re_w"])
    w = w.at[:, C_REMLP_W1:C_REMLP_W1 + E].set(raw["remlp_w1"])
    w = w.at[:, C_PETER:C_PETER + E].set(raw["peter_w"])
    w = w.at[:, C_MLP_W2:C_MLP_W2 + E2].set(raw["mlp_w2"])
    w = w.at[:, C_REMLP_W2:C_REMLP_W2 + E2].set(raw["remlp_w2"])

    b = jnp.zeros((1, BSLAB_W), f32)
    b = b.at[0, C_MLP_W1:C_MLP_W1 + E].set(raw["mlp_b1"])
    b = b.at[0, C_TOK:C_TOK + NTOKENS].set(raw["tok_b"])
    b = b.at[0, C_DE_RE:C_DE_RE + E].set(raw["de_re_b"])
    b = b.at[0, C_REMLP_W1:C_REMLP_W1 + E].set(raw["remlp_b1"])
    b = b.at[0, C_PETER:C_PETER + E].set(raw["peter_b"])
    b = b.at[0, C_MLP_W2:C_MLP_W2 + E2].set(raw["mlp_b2"])
    b = b.at[0, C_REMLP_W2:C_REMLP_W2 + E2].set(raw["remlp_b2"])
    b = b.at[0, C_MLP_W3:C_MLP_W3 + E2].set(raw["mlp_w3"])
    b = b.at[0, C_REMLP_W3:C_REMLP_W3 + E2].set(raw["remlp_w3"])
    b = b.at[0, C_LIN1_B:C_LIN1_B + E].set(raw["lin1_b"])

    scal = jnp.concatenate([raw["de_ra_w"], raw["de_ra_b"],
                            raw["mlp_b3"], raw["remlp_b3"]]).astype(f32)
    assert scal.shape == (SCAL_LEN,)

    return {
        "user_embed_ra": raw["user_embed_ra"],
        "item_embed_ra": raw["item_embed_ra"],
        "peter_word_embed": raw["peter_word_embed"],
        "lin1_w": raw["lin1_w"],
        "w_slab": w,
        "bias_slab": b,
        "scal": scal,
    }


def init_params(key):
    ks = jax.random.split(key, 20)
    kit = iter(ks)
    u = lambda k, shape, bnd: jax.random.uniform(k, shape, jnp.float32, -bnd, bnd)
    kaiming = (6.0 / E) ** 0.5

    raw = {
        # embeddings (normal(0, 0.1) as in init_weights)
        "user_embed_ra": 0.1 * jax.random.normal(next(kit), (NUSER, E), jnp.float32),
        "item_embed_ra": 0.1 * jax.random.normal(next(kit), (NITEM, E), jnp.float32),
        # linear1: (2E -> E)
        "lin1_w": u(next(kit), (2 * E, E), (1.0 / (2 * E)) ** 0.5),
        "lin1_b": jnp.zeros((E,), jnp.float32),
        # W_1 / W_2 (kaiming uniform)
        "W_1": u(next(kit), (E, E), kaiming),
        "W_2": u(next(kit), (E, E), kaiming),
        # de_ra: Linear(1, tgt_len); de_re: Linear(E, E)
        "de_ra_w": u(next(kit), (TGT_LEN,), 1.0),
        "de_ra_b": jnp.zeros((TGT_LEN,), jnp.float32),
        "de_re_w": u(next(kit), (E, E), (1.0 / E) ** 0.5),
        "de_re_b": jnp.zeros((E,), jnp.float32),
        # hidden2token: Linear(E, ntokens)
        "tok_w": u(next(kit), (E, NTOKENS), (1.0 / E) ** 0.5),
        "tok_b": jnp.zeros((NTOKENS,), jnp.float32),
        # PETER stub
        "peter_word_embed": 0.1 * jax.random.normal(next(kit), (NTOKENS, E), jnp.float32),
        "peter_w": u(next(kit), (E, E), (1.0 / E) ** 0.5),
        "peter_b": jnp.zeros((E,), jnp.float32),
    }
    # the two MLPs: uniform(-0.1, 0.1) weights, zero bias (per MLP.init_weights)
    for prefix in ("mlp", "remlp"):
        raw[f"{prefix}_w1"] = u(next(kit), (E, E), 0.1)
        raw[f"{prefix}_b1"] = jnp.zeros((E,), jnp.float32)
        raw[f"{prefix}_w2"] = u(next(kit), (E, E2), 0.1)
        raw[f"{prefix}_b2"] = jnp.zeros((E2,), jnp.float32)
        raw[f"{prefix}_w3"] = u(next(kit), (E2,), 0.1)     # Linear(E/2, 1) weight row
        raw[f"{prefix}_b3"] = jnp.zeros((1,), jnp.float32)
    return pack_params(raw)


# ================================== main =========================================

if __name__ == "__main__":
    key = jax.random.PRNGKey(0)
    k_param, k_user, k_item, k_rating, k_fake, k_seq = jax.random.split(key, 6)

    params = init_params(k_param)

    user   = jax.random.randint(k_user, (N_BATCH,), 0, NUSER)
    item   = jax.random.randint(k_item, (N_BATCH,), 0, NITEM)
    rating = jax.random.uniform(k_rating, (N_BATCH,), jnp.float32, 1.0, 5.0)  # unused by forward
    fake_r = jax.random.uniform(k_fake,   (N_BATCH,), jnp.float32, 1.0, 5.0)  # unused by forward
    seq    = jax.random.randint(k_seq, (SEQ_LEN, N_BATCH), 0, NTOKENS)

    fwd = jax.jit(functools.partial(model_forward, mode="Train"))
    outs = jax.block_until_ready(fwd(params, user, item, rating, fake_r, seq))

    # light sanity checks on shapes (Train path)
    assert outs[0].shape == (N_BATCH, E)                       # ra_c
    assert outs[4].shape == (N_BATCH, E)                       # uira_emb
    assert outs[5].shape == (SEQ_LEN, N_BATCH, E)              # uire_emb
    assert outs[6].shape == (TGT_LEN, N_BATCH, E)              # de_ra
    assert outs[7].shape == (N_BATCH, E)                       # de_re
    assert outs[13].shape == (N_BATCH,)                        # rating_ln
    assert outs[14].shape == (SEQ_LEN, N_BATCH, NTOKENS)       # ui_re_distri
    assert outs[15].shape == (N_BATCH, E)                      # con_hidden
    assert outs[16].shape == (N_BATCH,)                        # remlp

    # exercise the (cheaper) Eval path too
    fwd_eval = jax.jit(functools.partial(model_forward, mode="Eval"))
    outs_ev = jax.block_until_ready(fwd_eval(params, user, item, rating, fake_r, seq))
    assert outs_ev[14].shape == (N_BATCH, NTOKENS)             # eval: last step only

    print("KERNEL_OK")
</pallas_src>

<mosaic_0001>
module attributes {stable_mosaic.version = 11 : i64} {
  func.func @_fused_forward_kernel(%arg0: memref<18xf32, #tpu.memory_space<smem>>, %arg1: memref<8x128xf32, #tpu.memory_space<vmem>>, %arg2: memref<64x64xf32, #tpu.memory_space<vmem>>, %arg3: memref<128x64xf32, #tpu.memory_space<vmem>>, %arg4: memref<64x832xf32, #tpu.memory_space<vmem>>, %arg5: memref<1x960xf32, #tpu.memory_space<vmem>>, %arg6: memref<8x512xf32, #tpu.memory_space<vmem>>, %arg7: memref<64x384xf32, #tpu.memory_space<vmem>>, %arg8: memref<64x256xf32, #tpu.memory_space<vmem>>) attributes {dimension_semantics = [], scalar_prefetch = 0 : i64, scratch_operands = 0 : i64, tpu.core_type = #tpu.core_type<tc>} {
    %c0 = arith.constant 0 : index
    %c0_0 = arith.constant 0 : index
    %0 = vector.load %arg1[%c0, %c0_0] : memref<8x128xf32, #tpu.memory_space<vmem>>, vector<8x128xf32>
    %c0_1 = arith.constant 0 : index
    %c0_2 = arith.constant 0 : index
    %1 = vector.load %arg3[%c0_1, %c0_2] : memref<128x64xf32, #tpu.memory_space<vmem>>, vector<128x64xf32>
    %cst = arith.constant dense<0.000000e+00> : vector<8x64xf32>
    %2 = tpu.matmul %0, %1, %cst {dimension_numbers = #tpu.dot_dimension_numbers<[1], [0], [0], [1], [0, 0, 1, 1], [], []>} : vector<8x128xf32>, vector<128x64xf32>, vector<8x64xf32> -> vector<8x64xf32>
    %c0_3 = arith.constant 0 : index
    %c896 = arith.constant 896 : index
    %3 = vector.load %arg5[%c0_3, %c896] : memref<1x960xf32, #tpu.memory_space<vmem>>, vector<1x64xf32>
    %4 = vector.broadcast %3 : vector<1x64xf32> to vector<8x64xf32>
    %5 = arith.addf %2, %4 : vector<8x64xf32>
    %c0_4 = arith.constant 0 : index
    %c0_5 = arith.constant 0 : index
    %6 = vector.load %arg4[%c0_4, %c0_5] : memref<64x832xf32, #tpu.memory_space<vmem>>, vector<64x128xf32>
    %cst_6 = arith.constant dense<0.000000e+00> : vector<8x128xf32>
    %7 = tpu.matmul %5, %6, %cst_6 {dimension_numbers = #tpu.dot_dimension_numbers<[1], [0], [0], [1], [0, 0, 1, 1], [], []>} : vector<8x64xf32>, vector<64x128xf32>, vector<8x128xf32> -> vector<8x128xf32>
    %c0_7 = arith.constant 0 : index
    %c0_8 = arith.constant 0 : index
    %8 = vector.load %arg5[%c0_7, %c0_8] : memref<1x960xf32, #tpu.memory_space<vmem>>, vector<1x128xf32>
    %9 = vector.broadcast %8 : vector<1x128xf32> to vector<8x128xf32>
    %10 = arith.addf %7, %9 : vector<8x128xf32>
    %11 = vector.extract_strided_slice %10 {offsets = [0, 0], sizes = [8, 64], strides = [1, 1]} : vector<8x128xf32> to vector<8x64xf32>
    %12 = vector.extract_strided_slice %10 {offsets = [0, 64], sizes = [8, 64], strides = [1, 1]} : vector<8x128xf32> to vector<8x64xf32>
    %13 = arith.subf %5, %11 : vector<8x64xf32>
    %c0_9 = arith.constant 0 : index
    %c768 = arith.constant 768 : index
    %14 = vector.load %arg4[%c0_9, %c768] : memref<64x832xf32, #tpu.memory_space<vmem>>, vector<64x32xf32>
    %cst_10 = arith.constant dense<0.000000e+00> : vector<8x32xf32>
    %15 = tpu.matmul %12, %14, %cst_10 {dimension_numbers = #tpu.dot_dimension_numbers<[1], [0], [0], [1], [0, 0, 1, 1], [], []>} : vector<8x64xf32>, vector<64x32xf32>, vector<8x32xf32> -> vector<8x32xf32>
    %c0_11 = arith.constant 0 : index
    %c768_12 = arith.constant 768 : index
    %16 = vector.load %arg5[%c0_11, %c768_12] : memref<1x960xf32, #tpu.memory_space<vmem>>, vector<1x32xf32>
    %17 = vector.broadcast %16 : vector<1x32xf32> to vector<8x32xf32>
    %18 = arith.addf %15, %17 : vector<8x32xf32>
    %c0_13 = arith.constant 0 : index
    %c832 = arith.constant 832 : index
    %19 = vector.load %arg5[%c0_13, %c832] : memref<1x960xf32, #tpu.memory_space<vmem>>, vector<1x32xf32>
    %20 = vector.broadcast %19 : vector<1x32xf32> to vector<8x32xf32>
    %21 = arith.mulf %18, %20 : vector<8x32xf32>
    %cst_14 = arith.constant dense<0.000000e+00> : vector<8xf32>
    %22 = vector.multi_reduction <add>, %21, %cst_14 [1] : vector<8x32xf32> to vector<8xf32>
    %23 = vector.shape_cast %22 : vector<8xf32> to vector<8x1xf32>
    %c16 = arith.constant 16 : index
    %24 = memref.load %arg0[%c16] : memref<18xf32, #tpu.memory_space<smem>>
    %25 = vector.broadcast %24 : f32 to vector<8x1xf32>
    %26 = arith.addf %23, %25 : vector<8x1xf32>
    %27 = vector.shape_cast %5 : vector<8x64xf32> to vector<1x8x64xf32>
    %28 = vector.shape_cast %27 : vector<1x8x64xf32> to vector<1x8x64xf32>
    %29 = vector.broadcast %28 : vector<1x8x64xf32> to vector<8x8x64xf32>
    %30 = vector.shape_cast %29 : vector<8x8x64xf32> to vector<64x64xf32>
    %c0_15 = arith.constant 0 : index
    %c0_16 = arith.constant 0 : index
    %31 = vector.load %arg2[%c0_15, %c0_16] : memref<64x64xf32, #tpu.memory_space<vmem>>, vector<64x64xf32>
    %32 = arith.addf %31, %30 : vector<64x64xf32>
    %c0_17 = arith.constant 0 : index
    %c640 = arith.constant 640 : index
    %33 = vector.load %arg4[%c0_17, %c640] : memref<64x832xf32, #tpu.memory_space<vmem>>, vector<64x64xf32>
    %cst_18 = arith.constant dense<0.000000e+00> : vector<64x64xf32>
    %34 = tpu.matmul %32, %33, %cst_18 {dimension_numbers = #tpu.dot_dimension_numbers<[1], [0], [0], [1], [0, 0, 1, 1], [], []>} : vector<64x64xf32>, vector<64x64xf32>, vector<64x64xf32> -> vector<64x64xf32>
    %c0_19 = arith.constant 0 : index
    %c640_20 = arith.constant 640 : index
    %35 = vector.load %arg5[%c0_19, %c640_20] : memref<1x960xf32, #tpu.memory_space<vmem>>, vector<1x64xf32>
    %36 = vector.broadcast %35 : vector<1x64xf32> to vector<64x64xf32>
    %37 = arith.addf %34, %36 : vector<64x64xf32>
    %38 = math.tanh %37 : vector<64x64xf32>
    %c0_21 = arith.constant 0 : index
    %c128 = arith.constant 128 : index
    %39 = vector.load %arg4[%c0_21, %c128] : memref<64x832xf32, #tpu.memory_space<vmem>>, vector<64x320xf32>
    %cst_22 = arith.constant dense<0.000000e+00> : vector<64x320xf32>
    %40 = tpu.matmul %38, %39, %cst_22 {dimension_numbers = #tpu.dot_dimension_numbers<[1], [0], [0], [1], [0, 0, 1, 1], [], []>} : vector<64x64xf32>, vector<64x320xf32>, vector<64x320xf32> -> vector<64x320xf32>
    %c0_23 = arith.constant 0 : index
    %c128_24 = arith.constant 128 : index
    %41 = vector.load %arg5[%c0_23, %c128_24] : memref<1x960xf32, #tpu.memory_space<vmem>>, vector<1x320xf32>
    %42 = vector.broadcast %41 : vector<1x320xf32> to vector<64x320xf32>
    %43 = arith.addf %40, %42 : vector<64x320xf32>
    %44 = vector.extract_strided_slice %43 {offsets = [0, 0], sizes = [64, 256], strides = [1, 1]} : vector<64x320xf32> to vector<64x256xf32>
    %45 = vector.extract_strided_slice %43 {offsets = [0, 256], sizes = [64, 64], strides = [1, 1]} : vector<64x320xf32> to vector<64x64xf32>
    %46 = arith.subf %38, %45 : vector<64x64xf32>
    %cst_25 = arith.constant 0.000000e+00 : f32
    %47 = vector.broadcast %cst_25 : f32 to vector<8x64xf32>
    %cst_26 = arith.constant 0.000000e+00 : f32
    %48 = vector.broadcast %cst_26 : f32 to vector<8x64xf32>
    %49 = vector.extract_strided_slice %38 {offsets = [0, 0], sizes = [8, 64], strides = [1, 1]} : vector<64x64xf32> to vector<8x64xf32>
    %50 = arith.addf %47, %49 : vector<8x64xf32>
    %51 = vector.extract_strided_slice %45 {offsets = [0, 0], sizes = [8, 64], strides = [1, 1]} : vector<64x64xf32> to vector<8x64xf32>
    %52 = arith.addf %48, %51 : vector<8x64xf32>
    %53 = vector.extract_strided_slice %38 {offsets = [8, 0], sizes = [8, 64], strides = [1, 1]} : vector<64x64xf32> to vector<8x64xf32>
    %54 = arith.addf %50, %53 : vector<8x64xf32>
    %55 = vector.extract_strided_slice %45 {offsets = [8, 0], sizes = [8, 64], strides = [1, 1]} : vector<64x64xf32> to vector<8x64xf32>
    %56 = arith.addf %52, %55 : vector<8x64xf32>
    %57 = vector.extract_strided_slice %38 {offsets = [16, 0], sizes = [8, 64], strides = [1, 1]} : vector<64x64xf32> to vector<8x64xf32>
    %58 = arith.addf %54, %57 : vector<8x64xf32>
    %59 = vector.extract_strided_slice %45 {offsets = [16, 0], sizes = [8, 64], strides = [1, 1]} : vector<64x64xf32> to vector<8x64xf32>
    %60 = arith.addf %56, %59 : vector<8x64xf32>
    %61 = vector.extract_strided_slice %38 {offsets = [24, 0], sizes = [8, 64], strides = [1, 1]} : vector<64x64xf32> to vector<8x64xf32>
    %62 = arith.addf %58, %61 : vector<8x64xf32>
    %63 = vector.extract_strided_slice %45 {offsets = [24, 0], sizes = [8, 64], strides = [1, 1]} : vector<64x64xf32> to vector<8x64xf32>
    %64 = arith.addf %60, %63 : vector<8x64xf32>
    %65 = vector.extract_strided_slice %38 {offsets = [32, 0], sizes = [8, 64], strides = [1, 1]} : vector<64x64xf32> to vector<8x64xf32>
    %66 = arith.addf %62, %65 : vector<8x64xf32>
    %67 = vector.extract_strided_slice %45 {offsets = [32, 0], sizes = [8, 64], strides = [1, 1]} : vector<64x64xf32> to vector<8x64xf32>
    %68 = arith.addf %64, %67 : vector<8x64xf32>
    %69 = vector.extract_strided_slice %38 {offsets = [40, 0], sizes = [8, 64], strides = [1, 1]} : vector<64x64xf32> to vector<8x64xf32>
    %70 = arith.addf %66, %69 : vector<8x64xf32>
    %71 = vector.extract_strided_slice %45 {offsets = [40, 0], sizes = [8, 64], strides = [1, 1]} : vector<64x64xf32> to vector<8x64xf32>
    %72 = arith.addf %68, %71 : vector<8x64xf32>
    %73 = vector.extract_strided_slice %38 {offsets = [48, 0], sizes = [8, 64], strides = [1, 1]} : vector<64x64xf32> to vector<8x64xf32>
    %74 = arith.addf %70, %73 : vector<8x64xf32>
    %75 = vector.extract_strided_slice %45 {offsets = [48, 0], sizes = [8, 64], strides = [1, 1]} : vector<64x64xf32> to vector<8x64xf32>
    %76 = arith.addf %72, %75 : vector<8x64xf32>
    %77 = vector.extract_strided_slice %38 {offsets = [56, 0], sizes = [8, 64], strides = [1, 1]} : vector<64x64xf32> to vector<8x64xf32>
    %78 = arith.addf %74, %77 : vector<8x64xf32>
    %79 = vector.extract_strided_slice %45 {offsets = [56, 0], sizes = [8, 64], strides = [1, 1]} : vector<64x64xf32> to vector<8x64xf32>
    %80 = arith.addf %76, %79 : vector<8x64xf32>
    %cst_27 = arith.constant 1.250000e-01 : f32
    %81 = vector.broadcast %cst_27 : f32 to vector<8x64xf32>
    %82 = arith.mulf %78, %81 : vector<8x64xf32>
    %cst_28 = arith.constant 1.250000e-01 : f32
    %83 = vector.broadcast %cst_28 : f32 to vector<8x64xf32>
    %84 = arith.mulf %80, %83 : vector<8x64xf32>
    %85 = arith.subf %82, %84 : vector<8x64xf32>
    %86 = tpu.concatenate %82, %84, %85 in 0 : vector<8x64xf32>, vector<8x64xf32>, vector<8x64xf32> -> vector<24x64xf32>
    %c0_29 = arith.constant 0 : index
    %c512 = arith.constant 512 : index
    %87 = vector.load %arg4[%c0_29, %c512] : memref<64x832xf32, #tpu.memory_space<vmem>>, vector<64x128xf32>
    %cst_30 = arith.constant dense<0.000000e+00> : vector<24x128xf32>
    %88 = tpu.matmul %86, %87, %cst_30 {dimension_numbers = #tpu.dot_dimension_numbers<[1], [0], [0], [1], [0, 0, 1, 1], [], []>} : vector<24x64xf32>, vector<64x128xf32>, vector<24x128xf32> -> vector<24x128xf32>
    %c0_31 = arith.constant 0 : index
    %c512_32 = arith.constant 512 : index
    %89 = vector.load %arg5[%c0_31, %c512_32] : memref<1x960xf32, #tpu.memory_space<vmem>>, vector<1x128xf32>
    %90 = vector.broadcast %89 : vector<1x128xf32> to vector<24x128xf32>
    %91 = arith.addf %88, %90 : vector<24x128xf32>
    %92 = vector.extract_strided_slice %91 {offsets = [0, 0], sizes = [24, 64], strides = [1, 1]} : vector<24x128xf32> to vector<24x64xf32>
    %93 = vector.extract_strided_slice %91 {offsets = [16, 64], sizes = [8, 64], strides = [1, 1]} : vector<24x128xf32> to vector<8x64xf32>
    %c0_33 = arith.constant 0 : index
    %c800 = arith.constant 800 : index
    %94 = vector.load %arg4[%c0_33, %c800] : memref<64x832xf32, #tpu.memory_space<vmem>>, vector<64x32xf32>
    %cst_34 = arith.constant dense<0.000000e+00> : vector<8x32xf32>
    %95 = tpu.matmul %93, %94, %cst_34 {dimension_numbers = #tpu.dot_dimension_numbers<[1], [0], [0], [1], [0, 0, 1, 1], [], []>} : vector<8x64xf32>, vector<64x32xf32>, vector<8x32xf32> -> vector<8x32xf32>
    %c0_35 = arith.constant 0 : index
    %c800_36 = arith.constant 800 : index
    %96 = vector.load %arg5[%c0_35, %c800_36] : memref<1x960xf32, #tpu.memory_space<vmem>>, vector<1x32xf32>
    %97 = vector.broadcast %96 : vector<1x32xf32> to vector<8x32xf32>
    %98 = arith.addf %95, %97 : vector<8x32xf32>
    %c0_37 = arith.constant 0 : index
    %c864 = arith.constant 864 : index
    %99 = vector.load %arg5[%c0_37, %c864] : memref<1x960xf32, #tpu.memory_space<vmem>>, vector<1x32xf32>
    %100 = vector.broadcast %99 : vector<1x32xf32> to vector<8x32xf32>
    %101 = arith.mulf %98, %100 : vector<8x32xf32>
    %cst_38 = arith.constant dense<0.000000e+00> : vector<8xf32>
    %102 = vector.multi_reduction <add>, %101, %cst_38 [1] : vector<8x32xf32> to vector<8xf32>
    %103 = vector.shape_cast %102 : vector<8xf32> to vector<8x1xf32>
    %c17 = arith.constant 17 : index
    %104 = memref.load %arg0[%c17] : memref<18xf32, #tpu.memory_space<smem>>
    %105 = vector.broadcast %104 : f32 to vector<8x1xf32>
    %106 = arith.addf %103, %105 : vector<8x1xf32>
    %c0_39 = arith.constant 0 : index
    %c128_40 = arith.constant 128 : index
    %107 = vector.load %arg4[%c0_39, %c128_40] : memref<64x832xf32, #tpu.memory_space<vmem>>, vector<64x256xf32>
    %cst_41 = arith.constant dense<0.000000e+00> : vector<8x256xf32>
    %108 = tpu.matmul %13, %107, %cst_41 {dimension_numbers = #tpu.dot_dimension_numbers<[1], [0], [0], [1], [0, 0, 1, 1], [], []>} : vector<8x64xf32>, vector<64x256xf32>, vector<8x256xf32> -> vector<8x256xf32>
    %cst_42 = arith.constant 1.000000e-01 : f32
    %109 = vector.broadcast %cst_42 : f32 to vector<8x256xf32>
    %110 = arith.mulf %109, %108 : vector<8x256xf32>
    %111 = vector.shape_cast %110 : vector<8x256xf32> to vector<1x8x256xf32>
    %112 = vector.shape_cast %111 : vector<1x8x256xf32> to vector<1x8x256xf32>
    %113 = vector.broadcast %112 : vector<1x8x256xf32> to vector<8x8x256xf32>
    %114 = vector.shape_cast %113 : vector<8x8x256xf32> to vector<64x256xf32>
    %115 = arith.addf %44, %114 : vector<64x256xf32>
    %cst_43 = arith.constant dense<0xFF800000> : vector<64xf32>
    %116 = vector.multi_reduction <maximumf>, %115, %cst_43 [1] : vector<64x256xf32> to vector<64xf32>
    %117 = vector.shape_cast %116 : vector<64xf32> to vector<64x1xf32>
    %118 = vector.broadcast %117 : vector<64x1xf32> to vector<64x256xf32>
    %119 = arith.subf %115, %118 : vector<64x256xf32>
    %120 = math.exp %119 : vector<64x256xf32>
    %cst_44 = arith.constant dense<0.000000e+00> : vector<64xf32>
    %121 = vector.multi_reduction <add>, %120, %cst_44 [1] : vector<64x256xf32> to vector<64xf32>
    %122 = vector.shape_cast %121 : vector<64xf32> to vector<64x1xf32>
    %123 = math.log %122 : vector<64x1xf32>
    %124 = vector.broadcast %123 : vector<64x1xf32> to vector<64x256xf32>
    %125 = arith.subf %119, %124 : vector<64x256xf32>
    %c0_45 = arith.constant 0 : index
    %c0_46 = arith.constant 0 : index
    %126 = vector.load %arg8[%c0_45, %c0_46] : memref<64x256xf32, #tpu.memory_space<vmem>>, vector<64x256xf32>
    tpu.vector_store %arg8[%c0_45, %c0_46], %125 {strides = array<i32>} : memref<64x256xf32, #tpu.memory_space<vmem>>, vector<64x256xf32>,
    %c0_47 = arith.constant 0 : index
    %c0_48 = arith.constant 0 : index
    %127 = vector.load %arg6[%c0_47, %c0_48] : memref<8x512xf32, #tpu.memory_space<vmem>>, vector<8x64xf32>
    tpu.vector_store %arg6[%c0_47, %c0_48], %5 {strides = array<i32>} : memref<8x512xf32, #tpu.memory_space<vmem>>, vector<8x64xf32>,
    %c0_49 = arith.constant 0 : index
    %c64 = arith.constant 64 : index
    %128 = vector.load %arg6[%c0_49, %c64] : memref<8x512xf32, #tpu.memory_space<vmem>>, vector<8x64xf32>
    tpu.vector_store %arg6[%c0_49, %c64], %11 {strides = array<i32>} : memref<8x512xf32, #tpu.memory_space<vmem>>, vector<8x64xf32>,
    %c0_50 = arith.constant 0 : index
    %c128_51 = arith.constant 128 : index
    %129 = vector.load %arg6[%c0_50, %c128_51] : memref<8x512xf32, #tpu.memory_space<vmem>>, vector<8x64xf32>
    tpu.vector_store %arg6[%c0_50, %c128_51], %13 {strides = array<i32>} : memref<8x512xf32, #tpu.memory_space<vmem>>, vector<8x64xf32>,
    %130 = vector.extract_strided_slice %92 {offsets = [0, 0], sizes = [8, 64], strides = [1, 1]} : vector<24x64xf32> to vector<8x64xf32>
    %c0_52 = arith.constant 0 : index
    %c192 = arith.constant 192 : index
    %131 = vector.load %arg6[%c0_52, %c192] : memref<8x512xf32, #tpu.memory_space<vmem>>, vector<8x64xf32>
    tpu.vector_store %arg6[%c0_52, %c192], %130 {strides = array<i32>} : memref<8x512xf32, #tpu.memory_space<vmem>>, vector<8x64xf32>,
    %132 = vector.extract_strided_slice %92 {offsets = [8, 0], sizes = [8, 64], strides = [1, 1]} : vector<24x64xf32> to vector<8x64xf32>
    %c0_53 = arith.constant 0 : index
    %c256 = arith.constant 256 : index
    %133 = vector.load %arg6[%c0_53, %c256] : memref<8x512xf32, #tpu.memory_space<vmem>>, vector<8x64xf32>
    tpu.vector_store %arg6[%c0_53, %c256], %132 {strides = array<i32>} : memref<8x512xf32, #tpu.memory_space<vmem>>, vector<8x64xf32>,
    %134 = vector.extract_strided_slice %92 {offsets = [16, 0], sizes = [8, 64], strides = [1, 1]} : vector<24x64xf32> to vector<8x64xf32>
    %c0_54 = arith.constant 0 : index
    %c320 = arith.constant 320 : index
    %135 = vector.load %arg6[%c0_54, %c320] : memref<8x512xf32, #tpu.memory_space<vmem>>, vector<8x64xf32>
    tpu.vector_store %arg6[%c0_54, %c320], %134 {strides = array<i32>} : memref<8x512xf32, #tpu.memory_space<vmem>>, vector<8x64xf32>,
    %136 = vector.shape_cast %26 : vector<8x1xf32> to vector<8x1xf32>
    %137 = vector.broadcast %136 : vector<8x1xf32> to vector<8x64xf32>
    %c0_55 = arith.constant 0 : index
    %c384 = arith.constant 384 : index
    %138 = vector.load %arg6[%c0_55, %c384] : memref<8x512xf32, #tpu.memory_space<vmem>>, vector<8x64xf32>
    tpu.vector_store %arg6[%c0_55, %c384], %137 {strides = array<i32>} : memref<8x512xf32, #tpu.memory_space<vmem>>, vector<8x64xf32>,
    %139 = vector.shape_cast %106 : vector<8x1xf32> to vector<8x1xf32>
    %140 = vector.broadcast %139 : vector<8x1xf32> to vector<8x64xf32>
    %c0_56 = arith.constant 0 : index
    %c448 = arith.constant 448 : index
    %141 = vector.load %arg6[%c0_56, %c448] : memref<8x512xf32, #tpu.memory_space<vmem>>, vector<8x64xf32>
    tpu.vector_store %arg6[%c0_56, %c448], %140 {strides = array<i32>} : memref<8x512xf32, #tpu.memory_space<vmem>>, vector<8x64xf32>,
    %c0_57 = arith.constant 0 : index
    %c0_58 = arith.constant 0 : index
    %142 = vector.load %arg7[%c0_57, %c0_58] : memref<64x384xf32, #tpu.memory_space<vmem>>, vector<64x64xf32>
    tpu.vector_store %arg7[%c0_57, %c0_58], %38 {strides = array<i32>} : memref<64x384xf32, #tpu.memory_space<vmem>>, vector<64x64xf32>,
    %c0_59 = arith.constant 0 : index
    %c64_60 = arith.constant 64 : index
    %143 = vector.load %arg7[%c0_59, %c64_60] : memref<64x384xf32, #tpu.memory_space<vmem>>, vector<64x64xf32>
    tpu.vector_store %arg7[%c0_59, %c64_60], %45 {strides = array<i32>} : memref<64x384xf32, #tpu.memory_space<vmem>>, vector<64x64xf32>,
    %c0_61 = arith.constant 0 : index
    %c128_62 = arith.constant 128 : index
    %144 = vector.load %arg7[%c0_61, %c128_62] : memref<64x384xf32, #tpu.memory_space<vmem>>, vector<64x64xf32>
    tpu.vector_store %arg7[%c0_61, %c128_62], %46 {strides = array<i32>} : memref<64x384xf32, #tpu.memory_space<vmem>>, vector<64x64xf32>,
    %c0_63 = arith.constant 0 : index
    %145 = memref.load %arg0[%c0_63] : memref<18xf32, #tpu.memory_space<smem>>
    %c8 = arith.constant 8 : index
    %146 = memref.load %arg0[%c8] : memref<18xf32, #tpu.memory_space<smem>>
    %147 = vector.broadcast %145 : f32 to vector<8x64xf32>
    %148 = arith.mulf %5, %147 : vector<8x64xf32>
    %149 = vector.broadcast %146 : f32 to vector<8x64xf32>
    %150 = arith.addf %148, %149 : vector<8x64xf32>
    %c0_64 = arith.constant 0 : index
    %c192_65 = arith.constant 192 : index
    %151 = vector.load %arg7[%c0_64, %c192_65] : memref<64x384xf32, #tpu.memory_space<vmem>>, vector<8x64xf32>
    tpu.vector_store %arg7[%c0_64, %c192_65], %150 {strides = array<i32>} : memref<64x384xf32, #tpu.memory_space<vmem>>, vector<8x64xf32>,
    %152 = vector.broadcast %145 : f32 to vector<8x64xf32>
    %153 = arith.mulf %11, %152 : vector<8x64xf32>
    %154 = vector.broadcast %146 : f32 to vector<8x64xf32>
    %155 = arith.addf %153, %154 : vector<8x64xf32>
    %c0_66 = arith.constant 0 : index
    %c256_67 = arith.constant 256 : index
    %156 = vector.load %arg7[%c0_66, %c256_67] : memref<64x384xf32, #tpu.memory_space<vmem>>, vector<8x64xf32>
    tpu.vector_store %arg7[%c0_66, %c256_67], %155 {strides = array<i32>} : memref<64x384xf32, #tpu.memory_space<vmem>>, vector<8x64xf32>,
    %157 = vector.broadcast %145 : f32 to vector<8x64xf32>
    %158 = arith.mulf %13, %157 : vector<8x64xf32>
    %159 = vector.broadcast %146 : f32 to vector<8x64xf32>
    %160 = arith.addf %158, %159 : vector<8x64xf32>
    %c0_68 = arith.constant 0 : index
    %c320_69 = arith.constant 320 : index
    %161 = vector.load %arg7[%c0_68, %c320_69] : memref<64x384xf32, #tpu.memory_space<vmem>>, vector<8x64xf32>
    tpu.vector_store %arg7[%c0_68, %c320_69], %160 {strides = array<i32>} : memref<64x384xf32, #tpu.memory_space<vmem>>, vector<8x64xf32>,
    %c1 = arith.constant 1 : index
    %162 = memref.load %arg0[%c1] : memref<18xf32, #tpu.memory_space<smem>>
    %c9 = arith.constant 9 : index
    %163 = memref.load %arg0[%c9] : memref<18xf32, #tpu.memory_space<smem>>
    %164 = vector.broadcast %162 : f32 to vector<8x64xf32>
    %165 = arith.mulf %5, %164 : vector<8x64xf32>
    %166 = vector.broadcast %163 : f32 to vector<8x64xf32>
    %167 = arith.addf %165, %166 : vector<8x64xf32>
    %c8_70 = arith.constant 8 : index
    %c192_71 = arith.constant 192 : index
    %168 = vector.load %arg7[%c8_70, %c192_71] : memref<64x384xf32, #tpu.memory_space<vmem>>, vector<8x64xf32>
    tpu.vector_store %arg7[%c8_70, %c192_71], %167 {strides = array<i32>} : memref<64x384xf32, #tpu.memory_space<vmem>>, vector<8x64xf32>,
    %169 = vector.broadcast %162 : f32 to vector<8x64xf32>
    %170 = arith.mulf %11, %169 : vector<8x64xf32>
    %171 = vector.broadcast %163 : f32 to vector<8x64xf32>
    %172 = arith.addf %170, %171 : vector<8x64xf32>
    %c8_72 = arith.constant 8 : index
    %c256_73 = arith.constant 256 : index
    %173 = vector.load %arg7[%c8_72, %c256_73] : memref<64x384xf32, #tpu.memory_space<vmem>>, vector<8x64xf32>
    tpu.vector_store %arg7[%c8_72, %c256_73], %172 {strides = array<i32>} : memref<64x384xf32, #tpu.memory_space<vmem>>, vector<8x64xf32>,
    %174 = vector.broadcast %162 : f32 to vector<8x64xf32>
    %175 = arith.mulf %13, %174 : vector<8x64xf32>
    %176 = vector.broadcast %163 : f32 to vector<8x64xf32>
    %177 = arith.addf %175, %176 : vector<8x64xf32>
    %c8_74 = arith.constant 8 : index
    %c320_75 = arith.constant 320 : index
    %178 = vector.load %arg7[%c8_74, %c320_75] : memref<64x384xf32, #tpu.memory_space<vmem>>, vector<8x64xf32>
    tpu.vector_store %arg7[%c8_74, %c320_75], %177 {strides = array<i32>} : memref<64x384xf32, #tpu.memory_space<vmem>>, vector<8x64xf32>,
    %c2 = arith.constant 2 : index
    %179 = memref.load %arg0[%c2] : memref<18xf32, #tpu.memory_space<smem>>
    %c10 = arith.constant 10 : index
    %180 = memref.load %arg0[%c10] : memref<18xf32, #tpu.memory_space<smem>>
    %181 = vector.broadcast %179 : f32 to vector<8x64xf32>
    %182 = arith.mulf %5, %181 : vector<8x64xf32>
    %183 = vector.broadcast %180 : f32 to vector<8x64xf32>
    %184 = arith.addf %182, %183 : vector<8x64xf32>
    %c16_76 = arith.constant 16 : index
    %c192_77 = arith.constant 192 : index
    %185 = vector.load %arg7[%c16_76, %c192_77] : memref<64x384xf32, #tpu.memory_space<vmem>>, vector<8x64xf32>
    tpu.vector_store %arg7[%c16_76, %c192_77], %184 {strides = array<i32>} : memref<64x384xf32, #tpu.memory_space<vmem>>, vector<8x64xf32>,
    %186 = vector.broadcast %179 : f32 to vector<8x64xf32>
    %187 = arith.mulf %11, %186 : vector<8x64xf32>
    %188 = vector.broadcast %180 : f32 to vector<8x64xf32>
    %189 = arith.addf %187, %188 : vector<8x64xf32>
    %c16_78 = arith.constant 16 : index
    %c256_79 = arith.constant 256 : index
    %190 = vector.load %arg7[%c16_78, %c256_79] : memref<64x384xf32, #tpu.memory_space<vmem>>, vector<8x64xf32>
    tpu.vector_store %arg7[%c16_78, %c256_79], %189 {strides = array<i32>} : memref<64x384xf32, #tpu.memory_space<vmem>>, vector<8x64xf32>,
    %191 = vector.broadcast %179 : f32 to vector<8x64xf32>
    %192 = arith.mulf %13, %191 : vector<8x64xf32>
    %193 = vector.broadcast %180 : f32 to vector<8x64xf32>
    %194 = arith.addf %192, %193 : vector<8x64xf32>
    %c16_80 = arith.constant 16 : index
    %c320_81 = arith.constant 320 : index
    %195 = vector.load %arg7[%c16_80, %c320_81] : memref<64x384xf32, #tpu.memory_space<vmem>>, vector<8x64xf32>
    tpu.vector_store %arg7[%c16_80, %c320_81], %194 {strides = array<i32>} : memref<64x384xf32, #tpu.memory_space<vmem>>, vector<8x64xf32>,
    %c3 = arith.constant 3 : index
    %196 = memref.load %arg0[%c3] : memref<18xf32, #tpu.memory_space<smem>>
    %c11 = arith.constant 11 : index
    %197 = memref.load %arg0[%c11] : memref<18xf32, #tpu.memory_space<smem>>
    %198 = vector.broadcast %196 : f32 to vector<8x64xf32>
    %199 = arith.mulf %5, %198 : vector<8x64xf32>
    %200 = vector.broadcast %197 : f32 to vector<8x64xf32>
    %201 = arith.addf %199, %200 : vector<8x64xf32>
    %c24 = arith.constant 24 : index
    %c192_82 = arith.constant 192 : index
    %202 = vector.load %arg7[%c24, %c192_82] : memref<64x384xf32, #tpu.memory_space<vmem>>, vector<8x64xf32>
    tpu.vector_store %arg7[%c24, %c192_82], %201 {strides = array<i32>} : memref<64x384xf32, #tpu.memory_space<vmem>>, vector<8x64xf32>,
    %203 = vector.broadcast %196 : f32 to vector<8x64xf32>
    %204 = arith.mulf %11, %203 : vector<8x64xf32>
    %205 = vector.broadcast %197 : f32 to vector<8x64xf32>
    %206 = arith.addf %204, %205 : vector<8x64xf32>
    %c24_83 = arith.constant 24 : index
    %c256_84 = arith.constant 256 : index
    %207 = vector.load %arg7[%c24_83, %c256_84] : memref<64x384xf32, #tpu.memory_space<vmem>>, vector<8x64xf32>
    tpu.vector_store %arg7[%c24_83, %c256_84], %206 {strides = array<i32>} : memref<64x384xf32, #tpu.memory_space<vmem>>, vector<8x64xf32>,
    %208 = vector.broadcast %196 : f32 to vector<8x64xf32>
    %209 = arith.mulf %13, %208 : vector<8x64xf32>
    %210 = vector.broadcast %197 : f32 to vector<8x64xf32>
    %211 = arith.addf %209, %210 : vector<8x64xf32>
    %c24_85 = arith.constant 24 : index
    %c320_86 = arith.constant 320 : index
    %212 = vector.load %arg7[%c24_85, %c320_86] : memref<64x384xf32, #tpu.memory_space<vmem>>, vector<8x64xf32>
    tpu.vector_store %arg7[%c24_85, %c320_86], %211 {strides = array<i32>} : memref<64x384xf32, #tpu.memory_space<vmem>>, vector<8x64xf32>,
    %c4 = arith.constant 4 : index
    %213 = memref.load %arg0[%c4] : memref<18xf32, #tpu.memory_space<smem>>
    %c12 = arith.constant 12 : index
    %214 = memref.load %arg0[%c12] : memref<18xf32, #tpu.memory_space<smem>>
    %215 = vector.broadcast %213 : f32 to vector<8x64xf32>
    %216 = arith.mulf %5, %215 : vector<8x64xf32>
    %217 = vector.broadcast %214 : f32 to vector<8x64xf32>
    %218 = arith.addf %216, %217 : vector<8x64xf32>
    %c32 = arith.constant 32 : index
    %c192_87 = arith.constant 192 : index
    %219 = vector.load %arg7[%c32, %c192_87] : memref<64x384xf32, #tpu.memory_space<vmem>>, vector<8x64xf32>
    tpu.vector_store %arg7[%c32, %c192_87], %218 {strides = array<i32>} : memref<64x384xf32, #tpu.memory_space<vmem>>, vector<8x64xf32>,
    %220 = vector.broadcast %213 : f32 to vector<8x64xf32>
    %221 = arith.mulf %11, %220 : vector<8x64xf32>
    %222 = vector.broadcast %214 : f32 to vector<8x64xf32>
    %223 = arith.addf %221, %222 : vector<8x64xf32>
    %c32_88 = arith.constant 32 : index
    %c256_89 = arith.constant 256 : index
    %224 = vector.load %arg7[%c32_88, %c256_89] : memref<64x384xf32, #tpu.memory_space<vmem>>, vector<8x64xf32>
    tpu.vector_store %arg7[%c32_88, %c256_89], %223 {strides = array<i32>} : memref<64x384xf32, #tpu.memory_space<vmem>>, vector<8x64xf32>,
    %225 = vector.broadcast %213 : f32 to vector<8x64xf32>
    %226 = arith.mulf %13, %225 : vector<8x64xf32>
    %227 = vector.broadcast %214 : f32 to vector<8x64xf32>
    %228 = arith.addf %226, %227 : vector<8x64xf32>
    %c32_90 = arith.constant 32 : index
    %c320_91 = arith.constant 320 : index
    %229 = vector.load %arg7[%c32_90, %c320_91] : memref<64x384xf32, #tpu.memory_space<vmem>>, vector<8x64xf32>
    tpu.vector_store %arg7[%c32_90, %c320_91], %228 {strides = array<i32>} : memref<64x384xf32, #tpu.memory_space<vmem>>, vector<8x64xf32>,
    %c5 = arith.constant 5 : index
    %230 = memref.load %arg0[%c5] : memref<18xf32, #tpu.memory_space<smem>>
    %c13 = arith.constant 13 : index
    %231 = memref.load %arg0[%c13] : memref<18xf32, #tpu.memory_space<smem>>
    %232 = vector.broadcast %230 : f32 to vector<8x64xf32>
    %233 = arith.mulf %5, %232 : vector<8x64xf32>
    %234 = vector.broadcast %231 : f32 to vector<8x64xf32>
    %235 = arith.addf %233, %234 : vector<8x64xf32>
    %c40 = arith.constant 40 : index
    %c192_92 = arith.constant 192 : index
    %236 = vector.load %arg7[%c40, %c192_92] : memref<64x384xf32, #tpu.memory_space<vmem>>, vector<8x64xf32>
    tpu.vector_store %arg7[%c40, %c192_92], %235 {strides = array<i32>} : memref<64x384xf32, #tpu.memory_space<vmem>>, vector<8x64xf32>,
    %237 = vector.broadcast %230 : f32 to vector<8x64xf32>
    %238 = arith.mulf %11, %237 : vector<8x64xf32>
    %239 = vector.broadcast %231 : f32 to vector<8x64xf32>
    %240 = arith.addf %238, %239 : vector<8x64xf32>
    %c40_93 = arith.constant 40 : index
    %c256_94 = arith.constant 256 : index
    %241 = vector.load %arg7[%c40_93, %c256_94] : memref<64x384xf32, #tpu.memory_space<vmem>>, vector<8x64xf32>
    tpu.vector_store %arg7[%c40_93, %c256_94], %240 {strides = array<i32>} : memref<64x384xf32, #tpu.memory_space<vmem>>, vector<8x64xf32>,
    %242 = vector.broadcast %230 : f32 to vector<8x64xf32>
    %243 = arith.mulf %13, %242 : vector<8x64xf32>
    %244 = vector.broadcast %231 : f32 to vector<8x64xf32>
    %245 = arith.addf %243, %244 : vector<8x64xf32>
    %c40_95 = arith.constant 40 : index
    %c320_96 = arith.constant 320 : index
    %246 = vector.load %arg7[%c40_95, %c320_96] : memref<64x384xf32, #tpu.memory_space<vmem>>, vector<8x64xf32>
    tpu.vector_store %arg7[%c40_95, %c320_96], %245 {strides = array<i32>} : memref<64x384xf32, #tpu.memory_space<vmem>>, vector<8x64xf32>,
    %c6 = arith.constant 6 : index
    %247 = memref.load %arg0[%c6] : memref<18xf32, #tpu.memory_space<smem>>
    %c14 = arith.constant 14 : index
    %248 = memref.load %arg0[%c14] : memref<18xf32, #tpu.memory_space<smem>>
    %249 = vector.broadcast %247 : f32 to vector<8x64xf32>
    %250 = arith.mulf %5, %249 : vector<8x64xf32>
    %251 = vector.broadcast %248 : f32 to vector<8x64xf32>
    %252 = arith.addf %250, %251 : vector<8x64xf32>
    %c48 = arith.constant 48 : index
    %c192_97 = arith.constant 192 : index
    %253 = vector.load %arg7[%c48, %c192_97] : memref<64x384xf32, #tpu.memory_space<vmem>>, vector<8x64xf32>
    tpu.vector_store %arg7[%c48, %c192_97], %252 {strides = array<i32>} : memref<64x384xf32, #tpu.memory_space<vmem>>, vector<8x64xf32>,
    %254 = vector.broadcast %247 : f32 to vector<8x64xf32>
    %255 = arith.mulf %11, %254 : vector<8x64xf32>
    %256 = vector.broadcast %248 : f32 to vector<8x64xf32>
    %257 = arith.addf %255, %256 : vector<8x64xf32>
    %c48_98 = arith.constant 48 : index
    %c256_99 = arith.constant 256 : index
    %258 = vector.load %arg7[%c48_98, %c256_99] : memref<64x384xf32, #tpu.memory_space<vmem>>, vector<8x64xf32>
    tpu.vector_store %arg7[%c48_98, %c256_99], %257 {strides = array<i32>} : memref<64x384xf32, #tpu.memory_space<vmem>>, vector<8x64xf32>,
    %259 = vector.broadcast %247 : f32 to vector<8x64xf32>
    %260 = arith.mulf %13, %259 : vector<8x64xf32>
    %261 = vector.broadcast %248 : f32 to vector<8x64xf32>
    %262 = arith.addf %260, %261 : vector<8x64xf32>
    %c48_100 = arith.constant 48 : index
    %c320_101 = arith.constant 320 : index
    %263 = vector.load %arg7[%c48_100, %c320_101] : memref<64x384xf32, #tpu.memory_space<vmem>>, vector<8x64xf32>
    tpu.vector_store %arg7[%c48_100, %c320_101], %262 {strides = array<i32>} : memref<64x384xf32, #tpu.memory_space<vmem>>, vector<8x64xf32>,
    %c7 = arith.constant 7 : index
    %264 = memref.load %arg0[%c7] : memref<18xf32, #tpu.memory_space<smem>>
    %c15 = arith.constant 15 : index
    %265 = memref.load %arg0[%c15] : memref<18xf32, #tpu.memory_space<smem>>
    %266 = vector.broadcast %264 : f32 to vector<8x64xf32>
    %267 = arith.mulf %5, %266 : vector<8x64xf32>
    %268 = vector.broadcast %265 : f32 to vector<8x64xf32>
    %269 = arith.addf %267, %268 : vector<8x64xf32>
    %c56 = arith.constant 56 : index
    %c192_102 = arith.constant 192 : index
    %270 = vector.load %arg7[%c56, %c192_102] : memref<64x384xf32, #tpu.memory_space<vmem>>, vector<8x64xf32>
    tpu.vector_store %arg7[%c56, %c192_102], %269 {strides = array<i32>} : memref<64x384xf32, #tpu.memory_space<vmem>>, vector<8x64xf32>,
    %271 = vector.broadcast %264 : f32 to vector<8x64xf32>
    %272 = arith.mulf %11, %271 : vector<8x64xf32>
    %273 = vector.broadcast %265 : f32 to vector<8x64xf32>
    %274 = arith.addf %272, %273 : vector<8x64xf32>
    %c56_103 = arith.constant 56 : index
    %c256_104 = arith.constant 256 : index
    %275 = vector.load %arg7[%c56_103, %c256_104] : memref<64x384xf32, #tpu.memory_space<vmem>>, vector<8x64xf32>
    tpu.vector_store %arg7[%c56_103, %c256_104], %274 {strides = array<i32>} : memref<64x384xf32, #tpu.memory_space<vmem>>, vector<8x64xf32>,
    %276 = vector.broadcast %264 : f32 to vector<8x64xf32>
    %277 = arith.mulf %13, %276 : vector<8x64xf32>
    %278 = vector.broadcast %265 : f32 to vector<8x64xf32>
    %279 = arith.addf %277, %278 : vector<8x64xf32>
    %c56_105 = arith.constant 56 : index
    %c320_106 = arith.constant 320 : index
    %280 = vector.load %arg7[%c56_105, %c320_106] : memref<64x384xf32, #tpu.memory_space<vmem>>, vector<8x64xf32>
    tpu.vector_store %arg7[%c56_105, %c320_106], %279 {strides = array<i32>} : memref<64x384xf32, #tpu.memory_space<vmem>>, vector<8x64xf32>,
    return
  }
}

</mosaic_0001>

<llo_original>
// kernel: model_forward.1
$region0: #{model_forward.1}
  #allocation0 [shape = 'u32[]', space=smem, size = 0x4, offset = 0x4, fixed_abs, tag = 'smem constant byte address 0x4 - core index']
  #allocation1 [shape = 'u32[72,128]{1,0:T(1,128)}', space=vmem, size = 0x9000, scoped, tag = 'internal scratch']
  %s0 = inlined_call_operand.vmem [shape: f32[18], index: 0, kind: input, shape index: {}]
  %s1 = inlined_call_operand.vmem [shape: f32[8,128], index: 1, kind: input, shape index: {}]
  %s2 = inlined_call_operand.vmem [shape: f32[64,64], index: 2, kind: input, shape index: {}]
  %s3 = inlined_call_operand.vmem [shape: f32[128,64], index: 3, kind: input, shape index: {}]
  %s4 = inlined_call_operand.vmem [shape: f32[64,832], index: 4, kind: input, shape index: {}]
  %s5 = inlined_call_operand.vmem [shape: f32[1,960], index: 5, kind: input, shape index: {}]
  %s6 = inlined_call_operand.vmem [shape: f32[8,512], index: 6, kind: output, shape index: {0}]
  %s7 = inlined_call_operand.vmem [shape: f32[64,384], index: 7, kind: output, shape index: {1}]
  %s8 = inlined_call_operand.hbm [shape: f32[64,256], index: 8, kind: output, shape index: {2}]
  %9 = xla_tuple %s6, %s7, %s8
  %s10 = sld [smem:[#allocation0]]
  $region54: #{model_forward.1} parent=0
    _
  %s12 = ssub.s32 1, %s10
  %s13 = scalar_select 0, %s12, %s10
  $region1: #{model_forward.1} parent=0
    #allocation2 [shape = 'u8[512]{0}', space=smem, size = 0x200, scoped, tag = 'input window, operand 0, single buffered']
    #allocation3 [shape = 's32[1]{0}', space=sflag, size = 0x4, scoped, tag = 'scoped memory for model_forward.1']
    #allocation4 [shape = 's32[1]{0}', space=sflag, size = 0x4, scoped, tag = 'scoped memory for model_forward.1']
    #allocation5 [shape = 'u8[65536]{0}', space=vmem, size = 0x10000, scoped, tag = 'output window, operand 2, single buffered']
    %14 = vsyncpa [#allocation4], 0
    %15 = vsyncpa [#allocation3], 0
    // Predicated region
    $region2: #{model_forward.1} parent=1 // pred_check
      _
    $region3: #{model_forward.1} parent=1 // pred_check_branch
      %17 = sbr.rel (0) target = $region5
    $region4: #{model_forward.1} parent=1 // pred_region
      %19 = vsyncadd [#allocation4], 0
      %s21 = sshll.u32 %s0, 4
      %s22 = int_to_ptr.vmem [resolvable:$true] %s21
      %24 = dma.vmem_to_smem %s22, 16, [#allocation2], [#allocation4]
    $region5: #{model_forward.1} parent=1 // pred_fallthru
      _
    // Predicated region
    $region6: #{model_forward.1} parent=1 // pred_check
      _
    $region7: #{model_forward.1} parent=1 // pred_check_branch
      %26 = sbr.rel (0) target = $region9
    $region8: #{model_forward.1} parent=1 // pred_region
      _
    $region9: #{model_forward.1} parent=1 // pred_fallthru
      _
    // Predicated region
    $region10: #{model_forward.1} parent=1 // pred_check
      _
    $region11: #{model_forward.1} parent=1 // pred_check_branch
      %28 = sbr.rel (0) target = $region13
    $region12: #{model_forward.1} parent=1 // pred_region
      _
    $region13: #{model_forward.1} parent=1 // pred_fallthru
      _
    // Predicated region
    $region14: #{model_forward.1} parent=1 // pred_check
      _
    $region15: #{model_forward.1} parent=1 // pred_check_branch
      %30 = sbr.rel (0) target = $region17
    $region16: #{model_forward.1} parent=1 // pred_region
      _
    $region17: #{model_forward.1} parent=1 // pred_fallthru
      _
    // Predicated region
    $region18: #{model_forward.1} parent=1 // pred_check
      _
    $region19: #{model_forward.1} parent=1 // pred_check_branch
      %32 = sbr.rel (0) target = $region21
    $region20: #{model_forward.1} parent=1 // pred_region
      _
    $region21: #{model_forward.1} parent=1 // pred_fallthru
      _
    // Predicated region
    $region22: #{model_forward.1} parent=1 // pred_check
      _
    $region23: #{model_forward.1} parent=1 // pred_check_branch
      %34 = sbr.rel (0) target = $region25
    $region24: #{model_forward.1} parent=1 // pred_region
      _
    $region25: #{model_forward.1} parent=1 // pred_fallthru
      _
    // Predicated region
    $region26: #{model_forward.1} parent=1 // pred_check
      _
    $region27: #{model_forward.1} parent=1 // pred_check_branch
      %36 = sbr.rel (0) target = $region29
    $region28: #{model_forward.1} parent=1 // pred_region
      %38 = dma.done [#allocation4], 16
    $region29: #{model_forward.1} parent=1 // pred_fallthru
      _
    %39 = sfence
    %v40 = vld [vmem:[%s1] sm:$0xff]
    %v41 = vld [vmem:[%s3] sm:$0xff]
    %v42 = vld [vmem:[%s3 + $0x8] sm:$0xff]
    %v43 = vld [vmem:[%s3 + $0x10] sm:$0xff]
    %v44 = vld [vmem:[%s3 + $0x18] sm:$0xff]
    %v45 = vld [vmem:[%s3 + $0x20] sm:$0xff]
    %v46 = vld [vmem:[%s3 + $0x28] sm:$0xff]
    %v47 = vld [vmem:[%s3 + $0x30] sm:$0xff]
    %v48 = vld [vmem:[%s3 + $0x38] sm:$0xff]
    %v49 = vld [vmem:[%s3 + $0x40] sm:$0xff]
    %v50 = vld [vmem:[%s3 + $0x48] sm:$0xff]
    %v51 = vld [vmem:[%s3 + $0x50] sm:$0xff]
    %v52 = vld [vmem:[%s3 + $0x58] sm:$0xff]
    %v53 = vld [vmem:[%s3 + $0x60] sm:$0xff]
    %v54 = vld [vmem:[%s3 + $0x68] sm:$0xff]
    %v55 = vld [vmem:[%s3 + $0x70] sm:$0xff]
    %v56 = vld [vmem:[%s3 + $0x78] sm:$0xff]
    %v57 = vld [vmem:[%s5 + $0x7] sm:$0x1]
    %v59 = vperm.slane %v57, 0
    %61 = vmatpush.msra.mxu0 %v56
    %62 = vmatpush.msra.mxu0 %v55
    %63 = vmatpush.msra.mxu0 %v54
    %64 = vmatpush.msra.mxu0 %v53
    %65 = vmatpush.msra.mxu0 %v52
    %66 = vmatpush.msra.mxu0 %v51
    %67 = vmatpush.msra.mxu0 %v50
    %68 = vmatpush.msra.mxu0 %v49
    %69 = vmatpush.msra.mxu0 %v48
    %70 = vmatpush.msra.mxu0 %v47
    %71 = vmatpush.msra.mxu0 %v46
    %72 = vmatpush.msra.mxu0 %v45
    %73 = vmatpush.msra.mxu0 %v44
    %74 = vmatpush.msra.mxu0 %v43
    %75 = vmatpush.msra.mxu0 %v42
    %76 = vmatpush.msra.mxu0 %v41
    %77 = vmatmul.f32.gmra.mxu0 %v40
    %v78 = vpop.f32.mrf.mxu0
    %v79 = vadd.f32 %v59, %v78
    %80 = vdwg.mxu0
    %v81 = vld [vmem:[%s4] sm:$0xff]
    %v82 = vld [vmem:[%s4 + $0x38] sm:$0xff]
    %v83 = vld [vmem:[%s4 + $0x70] sm:$0xff]
    %v84 = vld [vmem:[%s4 + $0xa8] sm:$0xff]
    %v85 = vld [vmem:[%s4 + $0xe0] sm:$0xff]
    %v86 = vld [vmem:[%s4 + $0x118] sm:$0xff]
    %v87 = vld [vmem:[%s4 + $0x150] sm:$0xff]
    %v88 = vld [vmem:[%s4 + $0x188] sm:$0xff]
    %v89 = vld [vmem:[%s5] sm:$0x1]
    %v91 = vperm.slane %v89, 0
    %vm93 = vcmask 523264
    %v95 = vsel %vm93, %v79, 0
    %97 = vmatpush.msra.mxu0 0.0
    %98 = vmatpush.msra.mxu0 0.0
    %99 = vmatpush.msra.mxu0 0.0
    %100 = vmatpush.msra.mxu0 0.0
    %101 = vmatpush.msra.mxu0 0.0
    %102 = vmatpush.msra.mxu0 0.0
    %103 = vmatpush.msra.mxu0 0.0
    %104 = vmatpush.msra.mxu0 0.0
    %105 = vmatpush.msra.mxu0 %v88
    %106 = vmatpush.msra.mxu0 %v87
    %107 = vmatpush.msra.mxu0 %v86
    %108 = vmatpush.msra.mxu0 %v85
    %109 = vmatpush.msra.mxu0 %v84
    %110 = vmatpush.msra.mxu0 %v83
    %111 = vmatpush.msra.mxu0 %v82
    %112 = vmatpush.msra.mxu0 %v81
    %113 = vmatmul.f32.gmra.mxu0 %v95
    %v114 = vpop.f32.mrf.mxu0
    %v115 = vadd.f32 %v91, %v114
    %116 = vdwg.mxu0
    %v117 = vsub.f32 %v79, %v115
    %v118 = vld [vmem:[%s4 + $0x30] sm:$0xff]
    %v119 = vld [vmem:[%s4 + $0x68] sm:$0xff]
    %v120 = vld [vmem:[%s4 + $0xa0] sm:$0xff]
    %v121 = vld [vmem:[%s4 + $0xd8] sm:$0xff]
    %v122 = vld [vmem:[%s4 + $0x110] sm:$0xff]
    %v123 = vld [vmem:[%s4 + $0x148] sm:$0xff]
    %v124 = vld [vmem:[%s4 + $0x180] sm:$0xff]
    %v125 = vld [vmem:[%s4 + $0x1b8] sm:$0xff]
    %v126 = vld [vmem:[%s5 + $0x6] sm:$0x1]
    %v128 = vperm.slane %v126, 0
    %131 = vrot.lane.b32.xlu0 %v115, 64
    %v132 = vpop.permute.xlu0 %131
    %v133 = vsel %vm93, %v132, 0
    %135 = vmatpush.msra.mxu0 0.0
    %136 = vmatpush.msra.mxu0 0.0
    %137 = vmatpush.msra.mxu0 0.0
    %138 = vmatpush.msra.mxu0 0.0
    %139 = vmatpush.msra.mxu0 0.0
    %140 = vmatpush.msra.mxu0 0.0
    %141 = vmatpush.msra.mxu0 0.0
    %142 = vmatpush.msra.mxu0 0.0
    %143 = vmatpush.msra.mxu0 %v125
    %144 = vmatpush.msra.mxu0 %v124
    %145 = vmatpush.msra.mxu0 %v123
    %146 = vmatpush.msra.mxu0 %v122
    %147 = vmatpush.msra.mxu0 %v121
    %148 = vmatpush.msra.mxu0 %v120
    %149 = vmatpush.msra.mxu0 %v119
    %150 = vmatpush.msra.mxu0 %v118
    %151 = vmatmul.f32.gmra.mxu0 %v133
    %v152 = vpop.f32.mrf.mxu0
    %v153 = vadd.f32 %v128, %v152
    %154 = vdwg.mxu0
    %155 = vrot.lane.b32.xlu0 %v128, 64
    %v156 = vpop.permute.xlu0 %155
    %v158 = vmul.f32 %v153, %v156
    %vm159 = vcmask 261120
    %v160 = vsel %vm159, %v158, 0.0
    %161 = vadd.xlane.f32.xlu0 %v160
    %v162 = vpop.xlane.xlu0 %161
    %s163 = sld [smem:[#allocation2 + $0x10]]
    %v164 = vstv %s163
    %v165 = vadd.f32 %v162, %v164
    %v166 = vld [vmem:[%s2] sm:$0xff]
    %v167 = vld [vmem:[%s2 + $0x8] sm:$0xff]
    %v168 = vld [vmem:[%s2 + $0x10] sm:$0xff]
    %v169 = vld [vmem:[%s2 + $0x18] sm:$0xff]
    %v170 = vld [vmem:[%s2 + $0x20] sm:$0xff]
    %v171 = vld [vmem:[%s2 + $0x28] sm:$0xff]
    %v172 = vld [vmem:[%s2 + $0x30] sm:$0xff]
    %v173 = vld [vmem:[%s2 + $0x38] sm:$0xff]
    %v174 = vadd.f32 %v166, %v79
    %v175 = vadd.f32 %v167, %v79
    %v176 = vadd.f32 %v168, %v79
    %v177 = vadd.f32 %v169, %v79
    %v178 = vadd.f32 %v170, %v79
    %v179 = vadd.f32 %v171, %v79
    %v180 = vadd.f32 %v172, %v79
    %v181 = vadd.f32 %v173, %v79
    %v182 = vld [vmem:[%s4 + $0x28] sm:$0xff]
    %v183 = vld [vmem:[%s4 + $0x60] sm:$0xff]
    %v184 = vld [vmem:[%s4 + $0x98] sm:$0xff]
    %v185 = vld [vmem:[%s4 + $0xd0] sm:$0xff]
    %v186 = vld [vmem:[%s4 + $0x108] sm:$0xff]
    %v187 = vld [vmem:[%s4 + $0x140] sm:$0xff]
    %v188 = vld [vmem:[%s4 + $0x178] sm:$0xff]
    %v189 = vld [vmem:[%s4 + $0x1b0] sm:$0xff]
    %v190 = vld [vmem:[%s5 + $0x5] sm:$0x1]
    %v192 = vperm.slane %v190, 0
    %v195 = vsel %vm93, %v174, 0
    %v198 = vsel %vm93, %v175, 0
    %v201 = vsel %vm93, %v176, 0
    %v204 = vsel %vm93, %v177, 0
    %v207 = vsel %vm93, %v178, 0
    %v210 = vsel %vm93, %v179, 0
    %v213 = vsel %vm93, %v180, 0
    %v216 = vsel %vm93, %v181, 0
    %218 = vmatpush.msra.mxu0 0.0
    %219 = vmatpush.msra.mxu0 0.0
    %220 = vmatpush.msra.mxu0 0.0
    %221 = vmatpush.msra.mxu0 0.0
    %222 = vmatpush.msra.mxu0 0.0
    %223 = vmatpush.msra.mxu0 0.0
    %224 = vmatpush.msra.mxu0 0.0
    %225 = vmatpush.msra.mxu0 0.0
    %226 = vmatpush.msra.mxu0 %v189
    %227 = vmatpush.msra.mxu0 %v188
    %228 = vmatpush.msra.mxu0 %v187
    %229 = vmatpush.msra.mxu0 %v186
    %230 = vmatpush.msra.mxu0 %v185
    %231 = vmatpush.msra.mxu0 %v184
    %232 = vmatpush.msra.mxu0 %v183
    %233 = vmatpush.msra.mxu0 %v182
    %234 = vmatmul.f32.gmra.mxu0 %v195
    %v235 = vpop.f32.mrf.mxu0
    %v236 = vadd.f32 %v192, %v235
    %237 = vmatmul.f32.gmra.mxu0 %v198
    %v238 = vpop.f32.mrf.mxu0
    %v239 = vadd.f32 %v192, %v238
    %240 = vmatmul.f32.gmra.mxu0 %v201
    %v241 = vpop.f32.mrf.mxu0
    %v242 = vadd.f32 %v192, %v241
    %243 = vmatmul.f32.gmra.mxu0 %v204
    %v244 = vpop.f32.mrf.mxu0
    %v245 = vadd.f32 %v192, %v244
    %246 = vmatmul.f32.gmra.mxu0 %v207
    %v247 = vpop.f32.mrf.mxu0
    %v248 = vadd.f32 %v192, %v247
    %249 = vmatmul.f32.gmra.mxu0 %v210
    %v250 = vpop.f32.mrf.mxu0
    %v251 = vadd.f32 %v192, %v250
    %252 = vmatmul.f32.gmra.mxu0 %v213
    %v253 = vpop.f32.mrf.mxu0
    %v254 = vadd.f32 %v192, %v253
    %255 = vmatmul.f32.gmra.mxu0 %v216
    %v256 = vpop.f32.mrf.mxu0
    %v257 = vadd.f32 %v192, %v256
    %258 = vdwg.mxu0
    %v259 = vtanh.pop %v236
    %v260 = vtanh.pop %v239
    %v261 = vtanh.pop %v242
    %v262 = vtanh.pop %v245
    %v263 = vtanh.pop %v248
    %v264 = vtanh.pop %v251
    %v265 = vtanh.pop %v254
    %v266 = vtanh.pop %v257
    %v267 = vld [vmem:[%s4 + $0x8] sm:$0xff]
    %v268 = vld [vmem:[%s4 + $0x10] sm:$0xff]
    %v269 = vld [vmem:[%s4 + $0x18] sm:$0xff]
    %v270 = vld [vmem:[%s4 + $0x40] sm:$0xff]
    %v271 = vld [vmem:[%s4 + $0x48] sm:$0xff]
    %v272 = vld [vmem:[%s4 + $0x50] sm:$0xff]
    %v273 = vld [vmem:[%s4 + $0x78] sm:$0xff]
    %v274 = vld [vmem:[%s4 + $0x80] sm:$0xff]
    %v275 = vld [vmem:[%s4 + $0x88] sm:$0xff]
    %v276 = vld [vmem:[%s4 + $0xb0] sm:$0xff]
    %v277 = vld [vmem:[%s4 + $0xb8] sm:$0xff]
    %v278 = vld [vmem:[%s4 + $0xc0] sm:$0xff]
    %v279 = vld [vmem:[%s4 + $0xe8] sm:$0xff]
    %v280 = vld [vmem:[%s4 + $0xf0] sm:$0xff]
    %v281 = vld [vmem:[%s4 + $0xf8] sm:$0xff]
    %v282 = vld [vmem:[%s4 + $0x120] sm:$0xff]
    %v283 = vld [vmem:[%s4 + $0x128] sm:$0xff]
    %v284 = vld [vmem:[%s4 + $0x130] sm:$0xff]
    %v285 = vld [vmem:[%s4 + $0x158] sm:$0xff]
    %v286 = vld [vmem:[%s4 + $0x160] sm:$0xff]
    %v287 = vld [vmem:[%s4 + $0x168] sm:$0xff]
    %v288 = vld [vmem:[%s4 + $0x190] sm:$0xff]
    %v289 = vld [vmem:[%s4 + $0x198] sm:$0xff]
    %v290 = vld [vmem:[%s4 + $0x1a0] sm:$0xff]
    %v291 = vld [vmem:[%s5 + $0x1] sm:$0x7]
    %v293 = vperm.slane %v291, 0
    %v294 = vperm.slane %v291, 1
    %v295 = vperm.slane %v291, 2
    %v300 = vsel %vm93, %v259, 0
    %v303 = vsel %vm93, %v260, 0
    %v306 = vsel %vm93, %v261, 0
    %v309 = vsel %vm93, %v262, 0
    %v312 = vsel %vm93, %v263, 0
    %v315 = vsel %vm93, %v264, 0
    %v318 = vsel %vm93, %v265, 0
    %v321 = vsel %vm93, %v266, 0
    %323 = vmatpush.msra.mxu0 0.0
    %324 = vmatpush.msra.mxu0 0.0
    %325 = vmatpush.msra.mxu0 0.0
    %326 = vmatpush.msra.mxu0 0.0
    %327 = vmatpush.msra.mxu0 0.0
    %328 = vmatpush.msra.mxu0 0.0
    %329 = vmatpush.msra.mxu0 0.0
    %330 = vmatpush.msra.mxu0 0.0
    %331 = vmatpush.msra.mxu0 %v288
    %332 = vmatpush.msra.mxu0 %v285
    %333 = vmatpush.msra.mxu0 %v282
    %334 = vmatpush.msra.mxu0 %v279
    %335 = vmatpush.msra.mxu0 %v276
    %336 = vmatpush.msra.mxu0 %v273
    %337 = vmatpush.msra.mxu0 %v270
    %338 = vmatpush.msra.mxu0 %v267
    %339 = vmatmul.f32.gmra.mxu0 %v300
    %v340 = vpop.f32.mrf.mxu0
    %v341 = vadd.f32 %v293, %v340
    %342 = vmatmul.f32.gmra.mxu0 %v303
    %v343 = vpop.f32.mrf.mxu0
    %v344 = vadd.f32 %v293, %v343
    %345 = vmatmul.f32.gmra.mxu0 %v306
    %v346 = vpop.f32.mrf.mxu0
    %v347 = vadd.f32 %v293, %v346
    %348 = vmatmul.f32.gmra.mxu0 %v309
    %v349 = vpop.f32.mrf.mxu0
    %v350 = vadd.f32 %v293, %v349
    %351 = vmatmul.f32.gmra.mxu0 %v312
    %v352 = vpop.f32.mrf.mxu0
    %v353 = vadd.f32 %v293, %v352
    %354 = vmatmul.f32.gmra.mxu0 %v315
    %v355 = vpop.f32.mrf.mxu0
    %v356 = vadd.f32 %v293, %v355
    %357 = vmatmul.f32.gmra.mxu0 %v318
    %v358 = vpop.f32.mrf.mxu0
    %v359 = vadd.f32 %v293, %v358
    %360 = vmatmul.f32.gmra.mxu0 %v321
    %v361 = vpop.f32.mrf.mxu0
    %v362 = vadd.f32 %v293, %v361
    %363 = vdwg.mxu0
    %364 = vmatpush.msra.mxu0 0.0
    %365 = vmatpush.msra.mxu0 0.0
    %366 = vmatpush.msra.mxu0 0.0
    %367 = vmatpush.msra.mxu0 0.0
    %368 = vmatpush.msra.mxu0 0.0
    %369 = vmatpush.msra.mxu0 0.0
    %370 = vmatpush.msra.mxu0 0.0
    %371 = vmatpush.msra.mxu0 0.0
    %372 = vmatpush.msra.mxu0 %v289
    %373 = vmatpush.msra.mxu0 %v286
    %374 = vmatpush.msra.mxu0 %v283
    %375 = vmatpush.msra.mxu0 %v280
    %376 = vmatpush.msra.mxu0 %v277
    %377 = vmatpush.msra.mxu0 %v274
    %378 = vmatpush.msra.mxu0 %v271
    %379 = vmatpush.msra.mxu0 %v268
    %380 = vmatmul.f32.gmra.mxu0 %v300
    %v381 = vpop.f32.mrf.mxu0
    %v382 = vadd.f32 %v294, %v381
    %383 = vmatmul.f32.gmra.mxu0 %v303
    %v384 = vpop.f32.mrf.mxu0
    %v385 = vadd.f32 %v294, %v384
    %386 = vmatmul.f32.gmra.mxu0 %v306
    %v387 = vpop.f32.mrf.mxu0
    %v388 = vadd.f32 %v294, %v387
    %389 = vmatmul.f32.gmra.mxu0 %v309
    %v390 = vpop.f32.mrf.mxu0
    %v391 = vadd.f32 %v294, %v390
    %392 = vmatmul.f32.gmra.mxu0 %v312
    %v393 = vpop.f32.mrf.mxu0
    %v394 = vadd.f32 %v294, %v393
    %395 = vmatmul.f32.gmra.mxu0 %v315
    %v396 = vpop.f32.mrf.mxu0
    %v397 = vadd.f32 %v294, %v396
    %398 = vmatmul.f32.gmra.mxu0 %v318
    %v399 = vpop.f32.mrf.mxu0
    %v400 = vadd.f32 %v294, %v399
    %401 = vmatmul.f32.gmra.mxu0 %v321
    %v402 = vpop.f32.mrf.mxu0
    %v403 = vadd.f32 %v294, %v402
    %404 = vdwg.mxu0
    %405 = vmatpush.msra.mxu0 0.0
    %406 = vmatpush.msra.mxu0 0.0
    %407 = vmatpush.msra.mxu0 0.0
    %408 = vmatpush.msra.mxu0 0.0
    %409 = vmatpush.msra.mxu0 0.0
    %410 = vmatpush.msra.mxu0 0.0
    %411 = vmatpush.msra.mxu0 0.0
    %412 = vmatpush.msra.mxu0 0.0
    %413 = vmatpush.msra.mxu0 %v290
    %414 = vmatpush.msra.mxu0 %v287
    %415 = vmatpush.msra.mxu0 %v284
    %416 = vmatpush.msra.mxu0 %v281
    %417 = vmatpush.msra.mxu0 %v278
    %418 = vmatpush.msra.mxu0 %v275
    %419 = vmatpush.msra.mxu0 %v272
    %420 = vmatpush.msra.mxu0 %v269
    %421 = vmatmul.f32.gmra.mxu0 %v300
    %v422 = vpop.f32.mrf.mxu0
    %v423 = vadd.f32 %v295, %v422
    %424 = vmatmul.f32.gmra.mxu0 %v303
    %v425 = vpop.f32.mrf.mxu0
    %v426 = vadd.f32 %v295, %v425
    %427 = vmatmul.f32.gmra.mxu0 %v306
    %v428 = vpop.f32.mrf.mxu0
    %v429 = vadd.f32 %v295, %v428
    %430 = vmatmul.f32.gmra.mxu0 %v309
    %v431 = vpop.f32.mrf.mxu0
    %v432 = vadd.f32 %v295, %v431
    %433 = vmatmul.f32.gmra.mxu0 %v312
    %v434 = vpop.f32.mrf.mxu0
    %v435 = vadd.f32 %v295, %v434
    %436 = vmatmul.f32.gmra.mxu0 %v315
    %v437 = vpop.f32.mrf.mxu0
    %v438 = vadd.f32 %v295, %v437
    %439 = vmatmul.f32.gmra.mxu0 %v318
    %v440 = vpop.f32.mrf.mxu0
    %v441 = vadd.f32 %v295, %v440
    %442 = vmatmul.f32.gmra.mxu0 %v321
    %v443 = vpop.f32.mrf.mxu0
    %v444 = vadd.f32 %v295, %v443
    %445 = vdwg.mxu0
    %v446 = vsub.f32 %v259, %v423
    %v447 = vsub.f32 %v260, %v426
    %v448 = vsub.f32 %v261, %v429
    %v449 = vsub.f32 %v262, %v432
    %v450 = vsub.f32 %v263, %v435
    %v451 = vsub.f32 %v264, %v438
    %v452 = vsub.f32 %v265, %v441
    %v453 = vsub.f32 %v266, %v444
    %v454 = vadd.f32 %v259, 0.0
    %v455 = vadd.f32 %v423, 0.0
    %v456 = vadd.f32 %v454, %v260
    %v457 = vadd.f32 %v455, %v426
    %v458 = vadd.f32 %v456, %v261
    %v459 = vadd.f32 %v457, %v429
    %v460 = vadd.f32 %v458, %v262
    %v461 = vadd.f32 %v459, %v432
    %v462 = vadd.f32 %v460, %v263
    %v463 = vadd.f32 %v461, %v435
    %v464 = vadd.f32 %v462, %v264
    %v465 = vadd.f32 %v463, %v438
    %v466 = vadd.f32 %v464, %v265
    %v467 = vadd.f32 %v465, %v441
    %v468 = vadd.f32 %v466, %v266
    %v469 = vadd.f32 %v467, %v444
    %v470 = vmul.f32 %v468, 0.125
    %v471 = vmul.f32 %v469, 0.125
    %v472 = vsub.f32 %v470, %v471
    %v473 = vld [vmem:[%s4 + $0x20] sm:$0xff]
    %v474 = vld [vmem:[%s4 + $0x58] sm:$0xff]
    %v475 = vld [vmem:[%s4 + $0x90] sm:$0xff]
    %v476 = vld [vmem:[%s4 + $0xc8] sm:$0xff]
    %v477 = vld [vmem:[%s4 + $0x100] sm:$0xff]
    %v478 = vld [vmem:[%s4 + $0x138] sm:$0xff]
    %v479 = vld [vmem:[%s4 + $0x170] sm:$0xff]
    %v480 = vld [vmem:[%s4 + $0x1a8] sm:$0xff]
    %v481 = vld [vmem:[%s5 + $0x4] sm:$0x1]
    %v483 = vperm.slane %v481, 0
    %v486 = vsel %vm93, %v470, 0
    %v489 = vsel %vm93, %v471, 0
    %v492 = vsel %vm93, %v472, 0
    %494 = vmatpush.msra.mxu0 0.0
    %495 = vmatpush.msra.mxu0 0.0
    %496 = vmatpush.msra.mxu0 0.0
    %497 = vmatpush.msra.mxu0 0.0
    %498 = vmatpush.msra.mxu0 0.0
    %499 = vmatpush.msra.mxu0 0.0
    %500 = vmatpush.msra.mxu0 0.0
    %501 = vmatpush.msra.mxu0 0.0
    %502 = vmatpush.msra.mxu0 %v480
    %503 = vmatpush.msra.mxu0 %v479
    %504 = vmatpush.msra.mxu0 %v478
    %505 = vmatpush.msra.mxu0 %v477
    %506 = vmatpush.msra.mxu0 %v476
    %507 = vmatpush.msra.mxu0 %v475
    %508 = vmatpush.msra.mxu0 %v474
    %509 = vmatpush.msra.mxu0 %v473
    %510 = vmatmul.f32.gmra.mxu0 %v486
    %v511 = vpop.f32.mrf.mxu0
    %v512 = vadd.f32 %v483, %v511
    %513 = vmatmul.f32.gmra.mxu0 %v489
    %v514 = vpop.f32.mrf.mxu0
    %v515 = vadd.f32 %v483, %v514
    %516 = vmatmul.f32.gmra.mxu0 %v492
    %v517 = vpop.f32.mrf.mxu0
    %v518 = vadd.f32 %v483, %v517
    %519 = vdwg.mxu0
    %521 = vrot.lane.b32.xlu0 %v518, 64
    %v522 = vpop.permute.xlu0 %521
    %531 = vrot.lane.b32.xlu0 %v118, 96
    %v532 = vpop.permute.xlu0 %531
    %533 = vrot.lane.b32.xlu0 %v119, 96
    %v534 = vpop.permute.xlu0 %533
    %535 = vrot.lane.b32.xlu0 %v120, 96
    %v536 = vpop.permute.xlu0 %535
    %537 = vrot.lane.b32.xlu0 %v121, 96
    %v538 = vpop.permute.xlu0 %537
    %539 = vrot.lane.b32.xlu0 %v122, 96
    %v540 = vpop.permute.xlu0 %539
    %541 = vrot.lane.b32.xlu0 %v123, 96
    %v542 = vpop.permute.xlu0 %541
    %543 = vrot.lane.b32.xlu0 %v124, 96
    %v544 = vpop.permute.xlu0 %543
    %545 = vrot.lane.b32.xlu0 %v125, 96
    %v546 = vpop.permute.xlu0 %545
    %555 = vrot.lane.b32.xlu0 %v128, 96
    %v556 = vpop.permute.xlu0 %555
    %v558 = vsel %vm93, %v522, 0
    %560 = vmatpush.msra.mxu0 0.0
    %561 = vmatpush.msra.mxu0 0.0
    %562 = vmatpush.msra.mxu0 0.0
    %563 = vmatpush.msra.mxu0 0.0
    %564 = vmatpush.msra.mxu0 0.0
    %565 = vmatpush.msra.mxu0 0.0
    %566 = vmatpush.msra.mxu0 0.0
    %567 = vmatpush.msra.mxu0 0.0
    %568 = vmatpush.msra.mxu0 %v546
    %569 = vmatpush.msra.mxu0 %v544
    %570 = vmatpush.msra.mxu0 %v542
    %571 = vmatpush.msra.mxu0 %v540
    %572 = vmatpush.msra.mxu0 %v538
    %573 = vmatpush.msra.mxu0 %v536
    %574 = vmatpush.msra.mxu0 %v534
    %575 = vmatpush.msra.mxu0 %v532
    %576 = vmatmul.f32.gmra.mxu0 %v558
    %v577 = vpop.f32.mrf.mxu0
    %v578 = vadd.f32 %v556, %v577
    %579 = vdwg.mxu0
    %580 = vrot.lane.b32.xlu0 %v128, 32
    %v581 = vpop.permute.xlu0 %580
    %v583 = vmul.f32 %v578, %v581
    %v584 = vsel %vm159, %v583, 0.0
    %585 = vadd.xlane.f32.xlu0 %v584
    %v586 = vpop.xlane.xlu0 %585
    %s587 = sld [smem:[#allocation2 + $0x11]]
    %v588 = vstv %s587
    %v589 = vadd.f32 %v586, %v588
    %v590 = vld [vmem:[%s4 + $0x8] sm:$0xff]
    %v591 = vld [vmem:[%s4 + $0x10] sm:$0xff]
    %v592 = vld [vmem:[%s4 + $0x40] sm:$0xff]
    %v593 = vld [vmem:[%s4 + $0x48] sm:$0xff]
    %v594 = vld [vmem:[%s4 + $0x78] sm:$0xff]
    %v595 = vld [vmem:[%s4 + $0x80] sm:$0xff]
    %v596 = vld [vmem:[%s4 + $0xb0] sm:$0xff]
    %v597 = vld [vmem:[%s4 + $0xb8] sm:$0xff]
    %v598 = vld [vmem:[%s4 + $0xe8] sm:$0xff]
    %v599 = vld [vmem:[%s4 + $0xf0] sm:$0xff]
    %v600 = vld [vmem:[%s4 + $0x120] sm:$0xff]
    %v601 = vld [vmem:[%s4 + $0x128] sm:$0xff]
    %v602 = vld [vmem:[%s4 + $0x158] sm:$0xff]
    %v603 = vld [vmem:[%s4 + $0x160] sm:$0xff]
    %v604 = vld [vmem:[%s4 + $0x190] sm:$0xff]
    %v605 = vld [vmem:[%s4 + $0x198] sm:$0xff]
    %v607 = vsel %vm93, %v117, 0
    %609 = vmatpush.msra.mxu0 0.0
    %610 = vmatpush.msra.mxu0 0.0
    %611 = vmatpush.msra.mxu0 0.0
    %612 = vmatpush.msra.mxu0 0.0
    %613 = vmatpush.msra.mxu0 0.0
    %614 = vmatpush.msra.mxu0 0.0
    %615 = vmatpush.msra.mxu0 0.0
    %616 = vmatpush.msra.mxu0 0.0
    %617 = vmatpush.msra.mxu0 %v604
    %618 = vmatpush.msra.mxu0 %v602
    %619 = vmatpush.msra.mxu0 %v600
    %620 = vmatpush.msra.mxu0 %v598
    %621 = vmatpush.msra.mxu0 %v596
    %622 = vmatpush.msra.mxu0 %v594
    %623 = vmatpush.msra.mxu0 %v592
    %624 = vmatpush.msra.mxu0 %v590
    %625 = vmatmul.f32.gmra.mxu0 %v607
    %v626 = vpop.f32.mrf.mxu0
    %v627 = vadd.f32 0.0, %v626
    %628 = vdwg.mxu0
    %629 = vmatpush.msra.mxu0 0.0
    %630 = vmatpush.msra.mxu0 0.0
    %631 = vmatpush.msra.mxu0 0.0
    %632 = vmatpush.msra.mxu0 0.0
    %633 = vmatpush.msra.mxu0 0.0
    %634 = vmatpush.msra.mxu0 0.0
    %635 = vmatpush.msra.mxu0 0.0
    %636 = vmatpush.msra.mxu0 0.0
    %637 = vmatpush.msra.mxu0 %v605
    %638 = vmatpush.msra.mxu0 %v603
    %639 = vmatpush.msra.mxu0 %v601
    %640 = vmatpush.msra.mxu0 %v599
    %641 = vmatpush.msra.mxu0 %v597
    %642 = vmatpush.msra.mxu0 %v595
    %643 = vmatpush.msra.mxu0 %v593
    %644 = vmatpush.msra.mxu0 %v591
    %645 = vmatmul.f32.gmra.mxu0 %v607
    %v646 = vpop.f32.mrf.mxu0
    %v647 = vadd.f32 0.0, %v646
    %648 = vdwg.mxu0
    %v649 = vmul.f32 %v627, 0.1
    %v650 = vmul.f32 %v647, 0.1
    %v651 = vadd.f32 %v341, %v649
    %v652 = vadd.f32 %v382, %v650
    %v653 = vadd.f32 %v344, %v649
    %v654 = vadd.f32 %v385, %v650
    %v655 = vadd.f32 %v347, %v649
    %v656 = vadd.f32 %v388, %v650
    %v657 = vadd.f32 %v350, %v649
    %v658 = vadd.f32 %v391, %v650
    %v659 = vadd.f32 %v353, %v649
    %v660 = vadd.f32 %v394, %v650
    %v661 = vadd.f32 %v356, %v649
    %v662 = vadd.f32 %v397, %v650
    %v663 = vadd.f32 %v359, %v649
    %v664 = vadd.f32 %v400, %v650
    %v665 = vadd.f32 %v362, %v649
    %v666 = vadd.f32 %v403, %v650
    %v667 = vmax.f32 %v651, %v652
    %668 = vmax.xlane.f32.xlu0 %v667
    %v669 = vpop.xlane.xlu0 %668
    %v670 = vmax.f32 %v653, %v654
    %671 = vmax.xlane.f32.xlu0 %v670
    %v672 = vpop.xlane.xlu0 %671
    %v673 = vmax.f32 %v655, %v656
    %674 = vmax.xlane.f32.xlu0 %v673
    %v675 = vpop.xlane.xlu0 %674
    %v676 = vmax.f32 %v657, %v658
    %677 = vmax.xlane.f32.xlu0 %v676
    %v678 = vpop.xlane.xlu0 %677
    %v679 = vmax.f32 %v659, %v660
    %680 = vmax.xlane.f32.xlu0 %v679
    %v681 = vpop.xlane.xlu0 %680
    %v682 = vmax.f32 %v661, %v662
    %683 = vmax.xlane.f32.xlu0 %v682
    %v684 = vpop.xlane.xlu0 %683
    %v685 = vmax.f32 %v663, %v664
    %686 = vmax.xlane.f32.xlu0 %v685
    %v687 = vpop.xlane.xlu0 %686
    %v688 = vmax.f32 %v665, %v666
    %689 = vmax.xlane.f32.xlu0 %v688
    %v690 = vpop.xlane.xlu0 %689
    %v691 = vsub.f32 %v651, %v669
    %v692 = vsub.f32 %v652, %v669
    %v693 = vsub.f32 %v653, %v672
    %v694 = vsub.f32 %v654, %v672
    %v695 = vsub.f32 %v655, %v675
    %v696 = vsub.f32 %v656, %v675
    %v697 = vsub.f32 %v657, %v678
    %v698 = vsub.f32 %v658, %v678
    %v699 = vsub.f32 %v659, %v681
    %v700 = vsub.f32 %v660, %v681
    %v701 = vsub.f32 %v661, %v684
    %v702 = vsub.f32 %v662, %v684
    %v703 = vsub.f32 %v663, %v687
    %v704 = vsub.f32 %v664, %v687
    %v705 = vsub.f32 %v665, %v690
    %v706 = vsub.f32 %v666, %v690
    %v707 = vmul.f32 %v691, 1.442695
    %v708 = vpow.pop %v707
    %v709 = vmul.f32 %v692, 1.442695
    %v710 = vpow.pop %v709
    %v711 = vmul.f32 %v693, 1.442695
    %v712 = vpow.pop %v711
    %v713 = vmul.f32 %v694, 1.442695
    %v714 = vpow.pop %v713
    %v715 = vmul.f32 %v695, 1.442695
    %v716 = vpow.pop %v715
    %v717 = vmul.f32 %v696, 1.442695
    %v718 = vpow.pop %v717
    %v719 = vmul.f32 %v697, 1.442695
    %v720 = vpow.pop %v719
    %v721 = vmul.f32 %v698, 1.442695
    %v722 = vpow.pop %v721
    %v723 = vmul.f32 %v699, 1.442695
    %v724 = vpow.pop %v723
    %v725 = vmul.f32 %v700, 1.442695
    %v726 = vpow.pop %v725
    %v727 = vmul.f32 %v701, 1.442695
    %v728 = vpow.pop %v727
    %v729 = vmul.f32 %v702, 1.442695
    %v730 = vpow.pop %v729
    %v731 = vmul.f32 %v703, 1.442695
    %v732 = vpow.pop %v731
    %v733 = vmul.f32 %v704, 1.442695
    %v734 = vpow.pop %v733
    %v735 = vmul.f32 %v705, 1.442695
    %v736 = vpow.pop %v735
    %v737 = vmul.f32 %v706, 1.442695
    %v738 = vpow.pop %v737
    %v739 = vadd.f32 %v708, %v710
    %740 = vadd.xlane.f32.xlu0 %v739
    %v741 = vpop.xlane.xlu0 %740
    %v742 = vadd.f32 %v712, %v714
    %743 = vadd.xlane.f32.xlu0 %v742
    %v744 = vpop.xlane.xlu0 %743
    %v745 = vadd.f32 %v716, %v718
    %746 = vadd.xlane.f32.xlu0 %v745
    %v747 = vpop.xlane.xlu0 %746
    %v748 = vadd.f32 %v720, %v722
    %749 = vadd.xlane.f32.xlu0 %v748
    %v750 = vpop.xlane.xlu0 %749
    %v751 = vadd.f32 %v724, %v726
    %752 = vadd.xlane.f32.xlu0 %v751
    %v753 = vpop.xlane.xlu0 %752
    %v754 = vadd.f32 %v728, %v730
    %755 = vadd.xlane.f32.xlu0 %v754
    %v756 = vpop.xlane.xlu0 %755
    %v757 = vadd.f32 %v732, %v734
    %758 = vadd.xlane.f32.xlu0 %v757
    %v759 = vpop.xlane.xlu0 %758
    %v760 = vadd.f32 %v736, %v738
    %761 = vadd.xlane.f32.xlu0 %v760
    %v762 = vpop.xlane.xlu0 %761
    %v763 = vlog2.pop %v741
    %v764 = vmul.f32 %v763, 0.6931472
    %v765 = vlog2.pop %v744
    %v766 = vmul.f32 %v765, 0.6931472
    %v767 = vlog2.pop %v747
    %v768 = vmul.f32 %v767, 0.6931472
    %v769 = vlog2.pop %v750
    %v770 = vmul.f32 %v769, 0.6931472
    %v771 = vlog2.pop %v753
    %v772 = vmul.f32 %v771, 0.6931472
    %v773 = vlog2.pop %v756
    %v774 = vmul.f32 %v773, 0.6931472
    %v775 = vlog2.pop %v759
    %v776 = vmul.f32 %v775, 0.6931472
    %v777 = vlog2.pop %v762
    %v778 = vmul.f32 %v777, 0.6931472
    %v779 = vsub.f32 %v691, %v764
    %v780 = vsub.f32 %v692, %v764
    %v781 = vsub.f32 %v693, %v766
    %v782 = vsub.f32 %v694, %v766
    %v783 = vsub.f32 %v695, %v768
    %v784 = vsub.f32 %v696, %v768
    %v785 = vsub.f32 %v697, %v770
    %v786 = vsub.f32 %v698, %v770
    %v787 = vsub.f32 %v699, %v772
    %v788 = vsub.f32 %v700, %v772
    %v789 = vsub.f32 %v701, %v774
    %v790 = vsub.f32 %v702, %v774
    %v791 = vsub.f32 %v703, %v776
    %v792 = vsub.f32 %v704, %v776
    %v793 = vsub.f32 %v705, %v778
    %v794 = vsub.f32 %v706, %v778
    %795 = vst [vmem:[#allocation5] sm:$0xff] %v779
    %796 = vst [vmem:[#allocation5 + $0x8] sm:$0xff] %v780
    %797 = vst [vmem:[#allocation5 + $0x10] sm:$0xff] %v781
    %798 = vst [vmem:[#allocation5 + $0x18] sm:$0xff] %v782
    %799 = vst [vmem:[#allocation5 + $0x20] sm:$0xff] %v783
    %800 = vst [vmem:[#allocation5 + $0x28] sm:$0xff] %v784
    %801 = vst [vmem:[#allocation5 + $0x30] sm:$0xff] %v785
    %802 = vst [vmem:[#allocation5 + $0x38] sm:$0xff] %v786
    %803 = vst [vmem:[#allocation5 + $0x40] sm:$0xff] %v787
    %804 = vst [vmem:[#allocation5 + $0x48] sm:$0xff] %v788
    %805 = vst [vmem:[#allocation5 + $0x50] sm:$0xff] %v789
    %806 = vst [vmem:[#allocation5 + $0x58] sm:$0xff] %v790
    %807 = vst [vmem:[#allocation5 + $0x60] sm:$0xff] %v791
    %808 = vst [vmem:[#allocation5 + $0x68] sm:$0xff] %v792
    %809 = vst [vmem:[#allocation5 + $0x70] sm:$0xff] %v793
    %810 = vst [vmem:[#allocation5 + $0x78] sm:$0xff] %v794
    %811 = vst.msk [vmem:[%s6] sm:$0xff] %vm93, %v79
    %vm813 = vcmask 1048064
    %814 = vst.msk [vmem:[%s6] sm:$0xff] %vm813, %v132
    %815 = vst.msk [vmem:[%s6 + $0x8] sm:$0xff] %vm93, %v117
    %817 = vrot.lane.b32.xlu0 %v512, 64
    %v818 = vpop.permute.xlu0 %817
    %820 = vst.msk [vmem:[%s6 + $0x8] sm:$0xff] %vm813, %v818
    %821 = vst.msk [vmem:[%s6 + $0x10] sm:$0xff] %vm93, %v515
    %823 = vst.msk [vmem:[%s6 + $0x10] sm:$0xff] %vm813, %v522
    %824 = vst.msk [vmem:[%s6 + $0x18] sm:$0xff] %vm93, %v165
    %825 = vst.msk [vmem:[%s6 + $0x18] sm:$0xff] %vm813, %v589
    %826 = vst.msk [vmem:[%s7] sm:$0xff] %vm93, %v259
    %827 = vst.msk [vmem:[%s7 + $0x18] sm:$0xff] %vm93, %v260
    %828 = vst.msk [vmem:[%s7 + $0x30] sm:$0xff] %vm93, %v261
    %829 = vst.msk [vmem:[%s7 + $0x48] sm:$0xff] %vm93, %v262
    %830 = vst.msk [vmem:[%s7 + $0x60] sm:$0xff] %vm93, %v263
    %831 = vst.msk [vmem:[%s7 + $0x78] sm:$0xff] %vm93, %v264
    %832 = vst.msk [vmem:[%s7 + $0x90] sm:$0xff] %vm93, %v265
    %833 = vst.msk [vmem:[%s7 + $0xa8] sm:$0xff] %vm93, %v266
    %842 = vrot.lane.b32.xlu0 %v423, 64
    %v843 = vpop.permute.xlu0 %842
    %844 = vrot.lane.b32.xlu0 %v426, 64
    %v845 = vpop.permute.xlu0 %844
    %846 = vrot.lane.b32.xlu0 %v429, 64
    %v847 = vpop.permute.xlu0 %846
    %848 = vrot.lane.b32.xlu0 %v432, 64
    %v849 = vpop.permute.xlu0 %848
    %850 = vrot.lane.b32.xlu0 %v435, 64
    %v851 = vpop.permute.xlu0 %850
    %852 = vrot.lane.b32.xlu0 %v438, 64
    %v853 = vpop.permute.xlu0 %852
    %854 = vrot.lane.b32.xlu0 %v441, 64
    %v855 = vpop.permute.xlu0 %854
    %856 = vrot.lane.b32.xlu0 %v444, 64
    %v857 = vpop.permute.xlu0 %856
    %866 = vst.msk [vmem:[%s7] sm:$0xff] %vm813, %v843
    %867 = vst.msk [vmem:[%s7 + $0x18] sm:$0xff] %vm813, %v845
    %868 = vst.msk [vmem:[%s7 + $0x30] sm:$0xff] %vm813, %v847
    %869 = vst.msk [vmem:[%s7 + $0x48] sm:$0xff] %vm813, %v849
    %870 = vst.msk [vmem:[%s7 + $0x60] sm:$0xff] %vm813, %v851
    %871 = vst.msk [vmem:[%s7 + $0x78] sm:$0xff] %vm813, %v853
    %872 = vst.msk [vmem:[%s7 + $0x90] sm:$0xff] %vm813, %v855
    %873 = vst.msk [vmem:[%s7 + $0xa8] sm:$0xff] %vm813, %v857
    %874 = vst.msk [vmem:[%s7 + $0x8] sm:$0xff] %vm93, %v446
    %875 = vst.msk [vmem:[%s7 + $0x20] sm:$0xff] %vm93, %v447
    %876 = vst.msk [vmem:[%s7 + $0x38] sm:$0xff] %vm93, %v448
    %877 = vst.msk [vmem:[%s7 + $0x50] sm:$0xff] %vm93, %v449
    %878 = vst.msk [vmem:[%s7 + $0x68] sm:$0xff] %vm93, %v450
    %879 = vst.msk [vmem:[%s7 + $0x80] sm:$0xff] %vm93, %v451
    %880 = vst.msk [vmem:[%s7 + $0x98] sm:$0xff] %vm93, %v452
    %881 = vst.msk [vmem:[%s7 + $0xb0] sm:$0xff] %vm93, %v453
    %s882 = sld [smem:[#allocation2]]
    %s883 = sld [smem:[#allocation2 + $0x8]]
    %v884 = vstv %s882
    %v885 = vmul.f32 %v79, %v884
    %v886 = vstv %s883
    %v887 = vadd.f32 %v885, %v886
    %889 = vrot.lane.b32.xlu0 %v887, 64
    %v890 = vpop.permute.xlu0 %889
    %892 = vst.msk [vmem:[%s7 + $0x8] sm:$0xff] %vm813, %v890
    %v893 = vmul.f32 %v115, %v884
    %v894 = vadd.f32 %v893, %v886
    %895 = vst.msk [vmem:[%s7 + $0x10] sm:$0xff] %vm93, %v894
    %v896 = vmul.f32 %v117, %v884
    %v897 = vadd.f32 %v896, %v886
    %899 = vrot.lane.b32.xlu0 %v897, 64
    %v900 = vpop.permute.xlu0 %899
    %902 = vst.msk [vmem:[%s7 + $0x10] sm:$0xff] %vm813, %v900
    %s903 = sld [smem:[#allocation2 + $0x1]]
    %s904 = sld [smem:[#allocation2 + $0x9]]
    %v905 = vstv %s903
    %v906 = vmul.f32 %v79, %v905
    %v907 = vstv %s904
    %v908 = vadd.f32 %v906, %v907
    %910 = vrot.lane.b32.xlu0 %v908, 64
    %v911 = vpop.permute.xlu0 %910
    %913 = vst.msk [vmem:[%s7 + $0x20] sm:$0xff] %vm813, %v911
    %v914 = vmul.f32 %v115, %v905
    %v915 = vadd.f32 %v914, %v907
    %916 = vst.msk [vmem:[%s7 + $0x28] sm:$0xff] %vm93, %v915
    %v917 = vmul.f32 %v117, %v905
    %v918 = vadd.f32 %v917, %v907
    %920 = vrot.lane.b32.xlu0 %v918, 64
    %v921 = vpop.permute.xlu0 %920
    %923 = vst.msk [vmem:[%s7 + $0x28] sm:$0xff] %vm813, %v921
    %s924 = sld [smem:[#allocation2 + $0x2]]
    %s925 = sld [smem:[#allocation2 + $0xa]]
    %v926 = vstv %s924
    %v927 = vmul.f32 %v79, %v926
    %v928 = vstv %s925
    %v929 = vadd.f32 %v927, %v928
    %931 = vrot.lane.b32.xlu0 %v929, 64
    %v932 = vpop.permute.xlu0 %931
    %934 = vst.msk [vmem:[%s7 + $0x38] sm:$0xff] %vm813, %v932
    %v935 = vmul.f32 %v115, %v926
    %v936 = vadd.f32 %v935, %v928
    %937 = vst.msk [vmem:[%s7 + $0x40] sm:$0xff] %vm93, %v936
    %v938 = vmul.f32 %v117, %v926
    %v939 = vadd.f32 %v938, %v928
    %941 = vrot.lane.b32.xlu0 %v939, 64
    %v942 = vpop.permute.xlu0 %941
    %944 = vst.msk [vmem:[%s7 + $0x40] sm:$0xff] %vm813, %v942
    %s945 = sld [smem:[#allocation2 + $0x3]]
    %s946 = sld [smem:[#allocation2 + $0xb]]
    %v947 = vstv %s945
    %v948 = vmul.f32 %v79, %v947
    %v949 = vstv %s946
    %v950 = vadd.f32 %v948, %v949
    %952 = vrot.lane.b32.xlu0 %v950, 64
    %v953 = vpop.permute.xlu0 %952
    %955 = vst.msk [vmem:[%s7 + $0x50] sm:$0xff] %vm813, %v953
    %v956 = vmul.f32 %v115, %v947
    %v957 = vadd.f32 %v956, %v949
    %958 = vst.msk [vmem:[%s7 + $0x58] sm:$0xff] %vm93, %v957
    %v959 = vmul.f32 %v117, %v947
    %v960 = vadd.f32 %v959, %v949
    %962 = vrot.lane.b32.xlu0 %v960, 64
    %v963 = vpop.permute.xlu0 %962
    %965 = vst.msk [vmem:[%s7 + $0x58] sm:$0xff] %vm813, %v963
    %s966 = sld [smem:[#allocation2 + $0x4]]
    %s967 = sld [smem:[#allocation2 + $0xc]]
    %v968 = vstv %s966
    %v969 = vmul.f32 %v79, %v968
    %v970 = vstv %s967
    %v971 = vadd.f32 %v969, %v970
    %973 = vrot.lane.b32.xlu0 %v971, 64
    %v974 = vpop.permute.xlu0 %973
    %976 = vst.msk [vmem:[%s7 + $0x68] sm:$0xff] %vm813, %v974
    %v977 = vmul.f32 %v115, %v968
    %v978 = vadd.f32 %v977, %v970
    %979 = vst.msk [vmem:[%s7 + $0x70] sm:$0xff] %vm93, %v978
    %v980 = vmul.f32 %v117, %v968
    %v981 = vadd.f32 %v980, %v970
    %983 = vrot.lane.b32.xlu0 %v981, 64
    %v984 = vpop.permute.xlu0 %983
    %986 = vst.msk [vmem:[%s7 + $0x70] sm:$0xff] %vm813, %v984
    %s987 = sld [smem:[#allocation2 + $0x5]]
    %s988 = sld [smem:[#allocation2 + $0xd]]
    %v989 = vstv %s987
    %v990 = vmul.f32 %v79, %v989
    %v991 = vstv %s988
    %v992 = vadd.f32 %v990, %v991
    %994 = vrot.lane.b32.xlu0 %v992, 64
    %v995 = vpop.permute.xlu0 %994
    %997 = vst.msk [vmem:[%s7 + $0x80] sm:$0xff] %vm813, %v995
    %v998 = vmul.f32 %v115, %v989
    %v999 = vadd.f32 %v998, %v991
    %1000 = vst.msk [vmem:[%s7 + $0x88] sm:$0xff] %vm93, %v999
    %v1001 = vmul.f32 %v117, %v989
    %v1002 = vadd.f32 %v1001, %v991
    %1004 = vrot.lane.b32.xlu0 %v1002, 64
    %v1005 = vpop.permute.xlu0 %1004
    %1007 = vst.msk [vmem:[%s7 + $0x88] sm:$0xff] %vm813, %v1005
    %s1008 = sld [smem:[#allocation2 + $0x6]]
    %s1009 = sld [smem:[#allocation2 + $0xe]]
    %v1010 = vstv %s1008
    %v1011 = vmul.f32 %v79, %v1010
    %v1012 = vstv %s1009
    %v1013 = vadd.f32 %v1011, %v1012
    %1015 = vrot.lane.b32.xlu0 %v1013, 64
    %v1016 = vpop.permute.xlu0 %1015
    %1018 = vst.msk [vmem:[%s7 + $0x98] sm:$0xff] %vm813, %v1016
    %v1019 = vmul.f32 %v115, %v1010
    %v1020 = vadd.f32 %v1019, %v1012
    %1021 = vst.msk [vmem:[%s7 + $0xa0] sm:$0xff] %vm93, %v1020
    %v1022 = vmul.f32 %v117, %v1010
    %v1023 = vadd.f32 %v1022, %v1012
    %1025 = vrot.lane.b32.xlu0 %v1023, 64
    %v1026 = vpop.permute.xlu0 %1025
    %1028 = vst.msk [vmem:[%s7 + $0xa0] sm:$0xff] %vm813, %v1026
    %s1029 = sld [smem:[#allocation2 + $0x7]]
    %s1030 = sld [smem:[#allocation2 + $0xf]]
    %v1031 = vstv %s1029
    %v1032 = vmul.f32 %v79, %v1031
    %v1033 = vstv %s1030
    %v1034 = vadd.f32 %v1032, %v1033
    %1036 = vrot.lane.b32.xlu0 %v1034, 64
    %v1037 = vpop.permute.xlu0 %1036
    %1039 = vst.msk [vmem:[%s7 + $0xb0] sm:$0xff] %vm813, %v1037
    %v1040 = vmul.f32 %v115, %v1031
    %v1041 = vadd.f32 %v1040, %v1033
    %1042 = vst.msk [vmem:[%s7 + $0xb8] sm:$0xff] %vm93, %v1041
    %v1043 = vmul.f32 %v117, %v1031
    %v1044 = vadd.f32 %v1043, %v1033
    %1046 = vrot.lane.b32.xlu0 %v1044, 64
    %v1047 = vpop.permute.xlu0 %1046
    %1049 = vst.msk [vmem:[%s7 + $0xb8] sm:$0xff] %vm813, %v1047
    // Predicated region
    $region30: #{model_forward.1} parent=1 // pred_check
      _
    $region31: #{model_forward.1} parent=1 // pred_check_branch
      %1051 = sbr.rel (0) target = $region33
    $region32: #{model_forward.1} parent=1 // pred_region
      _
    $region33: #{model_forward.1} parent=1 // pred_fallthru
      _
    // Predicated region
    $region34: #{model_forward.1} parent=1 // pred_check
      _
    $region35: #{model_forward.1} parent=1 // pred_check_branch
      %1053 = sbr.rel (0) target = $region37
    $region36: #{model_forward.1} parent=1 // pred_region
      _
    $region37: #{model_forward.1} parent=1 // pred_fallthru
      _
    // Predicated region
    $region38: #{model_forward.1} parent=1 // pred_check
      _
    $region39: #{model_forward.1} parent=1 // pred_check_branch
      %1055 = sbr.rel (0) target = $region41
    $region40: #{model_forward.1} parent=1 // pred_region
      %1057 = vsyncadd [#allocation3], 0
      %s1058 = sshll.u32 [#allocation5], 4
      %s1059 = int_to_ptr.vmem [resolvable:$true] %s1058
      %s1060 = sshll.u32 %s8, 4
      %s1061 = int_to_ptr.hbm [resolvable:$true] %s1060
      %1066 = dma.vmem_to_hbm [thread:$0]  %s1059, 2048, %s1061, [#allocation3], 256, 256, 16
    $region41: #{model_forward.1} parent=1 // pred_fallthru
      _
    // Predicated region
    $region42: #{model_forward.1} parent=1 // pred_check
      _
    $region43: #{model_forward.1} parent=1 // pred_check_branch
      %1068 = sbr.rel (0) target = $region45
    $region44: #{model_forward.1} parent=1 // pred_region
      _
    $region45: #{model_forward.1} parent=1 // pred_fallthru
      _
    // Predicated region
    $region46: #{model_forward.1} parent=1 // pred_check
      _
    $region47: #{model_forward.1} parent=1 // pred_check_branch
      %1070 = sbr.rel (0) target = $region49
    $region48: #{model_forward.1} parent=1 // pred_region
      _
    $region49: #{model_forward.1} parent=1 // pred_fallthru
      _
    // Predicated region
    $region50: #{model_forward.1} parent=1 // pred_check
      _
    $region51: #{model_forward.1} parent=1 // pred_check_branch
      %1072 = sbr.rel (0) target = $region53
    $region52: #{model_forward.1} parent=1 // pred_region
      %1074 = dma.done [#allocation3], 2048
    $region53: #{model_forward.1} parent=1 // pred_fallthru
      _
    %1075 = vsyncpa [#allocation3], 1
    %1076 = vsyncpa [#allocation4], 1

</llo_original>
